<compile_context>
chip_gen: v5e
topology: v5e:2x2
jax: 0.10.0
libtpu: 0.0.40
codegen_flags: <defaults>
</compile_context>

<pallas_src>
import jax
import jax.numpy as jnp
from jax import lax
from jax.experimental import pallas as pl
from jax.experimental.pallas import tpu as pltpu


def _make_lstm_ae_kernel(T, B, He, F):
    """Build the fused LSTM-autoencoder kernel for static (T, B, He, F)."""
    K = He + 2 * F          # LHS width: [h_enc | h_dec | x_next]
    N = 4 * He + 4 * F      # RHS width: [enc gates | dec gates]

    def lstm_cell(gates, c, H):
        # PyTorch gate order i, f, g, o.  4H <= 128 lanes here, so one sigmoid
        # + one tanh over the whole gate vector (2 dense EUP pushes), then slice.
        sg = jax.nn.sigmoid(gates)
        tg = jnp.tanh(gates)
        i = sg[:, 0 * H:1 * H]
        f = sg[:, 1 * H:2 * H]
        g = tg[:, 2 * H:3 * H]
        o = sg[:, 3 * H:4 * H]
        c_new = f * c + i * g
        h_new = o * jnp.tanh(c_new)
        return h_new, c_new

    def kernel(x_ref, rhs_ref, bias_ref, out_ref, lhs_ref):
        # Hoist loop-invariant load / broadcast (JAX does not CSE these).
        rhs = rhs_ref[...]                                  # (K, N)
        bias = jnp.broadcast_to(bias_ref[...], (B, N))      # (B, N)

        def fused_push(h_e, h_d, x_next):
            # Assemble LHS = [h_e | h_d | x_next] at static lane offsets in a
            # tiny VMEM scratch (masked vst), then ONE MXU push vs the block RHS:
            #   result[:, :4He] = x_next @ W_ih_e + h_e @ W_hh_e + b_e  (enc preact t+1)
            #   result[:, 4He:] = h_e @ W_ih_d  + h_d @ W_hh_d + b_d    (dec preact t)
            lhs_ref[:, 0:He] = h_e
            lhs_ref[:, He:He + F] = h_d
            lhs_ref[:, He + F:He + 2 * F] = x_next
            fused = jnp.dot(lhs_ref[...], rhs,
                            preferred_element_type=jnp.float32)
            return fused + bias
            # TODO(synk): if the Mosaic dump shows the (K, N) RHS re-streamed
            # every step, switch to pltpu.matmul_push_rhs once before the loop
            # + matmul_acc_lhs / matmul_pop per step (weight-stationary MXU).

        zeros_He = jnp.zeros((B, He), jnp.float32)
        zeros_F = jnp.zeros((B, F), jnp.float32)

        # Priming push: h_e(-1) = h_d(-1) = 0, so enc_gates(0) = x_0 @ W_ih_e + b_e.
        enc_gates = fused_push(zeros_He, zeros_F, x_ref[0:B, :])[:, :4 * He]

        c_e = zeros_He
        h_d = zeros_F
        c_d = zeros_F

        # T is small and static: full unroll, state stays in vregs, static slices.
        for t in range(T):
            h_e, c_e = lstm_cell(enc_gates, c_e, He)

            t_next = min(t + 1, T - 1)          # last step's enc preact is unused
            gates = fused_push(h_e, h_d,
                               x_ref[t_next * B:(t_next + 1) * B, :])
            enc_gates = gates[:, :4 * He]                   # lane-128-aligned slice
            h_d, c_d = lstm_cell(gates[:, 4 * He:], c_d, F)

            out_ref[t * B:(t + 1) * B, :] = h_d

    return kernel


def init_lstm_params(key, input_size, hidden_size):
    """PyTorch-style uniform(-1/sqrt(H), 1/sqrt(H)) init; matmul-ready layout."""
    k = 1.0 / jnp.sqrt(jnp.float32(hidden_size))
    k1, k2, k3, k4 = jax.random.split(key, 4)
    w_ih = jax.random.uniform(k1, (4 * hidden_size, input_size), jnp.float32, -k, k)
    w_hh = jax.random.uniform(k2, (4 * hidden_size, hidden_size), jnp.float32, -k, k)
    b_ih = jax.random.uniform(k3, (4 * hidden_size,), jnp.float32, -k, k)
    b_hh = jax.random.uniform(k4, (4 * hidden_size,), jnp.float32, -k, k)
    return {
        "wih": jnp.transpose(w_ih),                 # (input, 4H)  for x @ W
        "whh": jnp.transpose(w_hh),                 # (H, 4H)      for h @ W
        "b":   (b_ih + b_hh).reshape(1, -1),        # (1, 4H)
    }


def prepare_fused_params(enc_params, dec_params):
    """One-time weight assembly (hoisted off the per-call path).

    Block RHS rows correspond to LHS segments [h_e | h_d | x_next]:
        [[W_hh_e, W_ih_d],
         [  0   , W_hh_d],
         [W_ih_e,   0   ]]   -> shape (He + 2F, 4He + 4F)
    """
    He = enc_params["whh"].shape[0]
    F = dec_params["whh"].shape[0]
    K = He + 2 * F
    N = 4 * He + 4 * F
    rhs = jnp.zeros((K, N), jnp.float32)
    rhs = rhs.at[0:He, 0:4 * He].set(enc_params["whh"])        # W_hh_e
    rhs = rhs.at[0:He, 4 * He:N].set(dec_params["wih"])        # W_ih_d
    rhs = rhs.at[He:He + F, 4 * He:N].set(dec_params["whh"])   # W_hh_d
    rhs = rhs.at[He + F:K, 0:4 * He].set(enc_params["wih"])    # W_ih_e
    bias = jnp.concatenate([enc_params["b"], dec_params["b"]], axis=1)  # (1, N)
    return {"rhs": rhs, "bias": bias}


@jax.jit
def lstm_autoencoder_forward(x, fused):
    """x: (B, T, n_features) f32 -> decoded (B, T, n_features) f32."""
    B, T, F = x.shape
    rhs, bias = fused["rhs"], fused["bias"]
    N = bias.shape[1]
    He = (N - 4 * F) // 4
    K = He + 2 * F
    assert rhs.shape == (K, N)

    # Time-major, flattened to 2-D: each timestep is a dense 2-row slice of a
    # (T*B, F) slab (2 sublane tiles) instead of T separately padded tiles.
    x_flat = jnp.transpose(x, (1, 0, 2)).reshape(T * B, F)

    kernel = _make_lstm_ae_kernel(T, B, He, F)
    vmem = pl.BlockSpec(memory_space=pltpu.MemorySpace.VMEM)
    out_flat = pl.pallas_call(
        kernel,
        out_shape=jax.ShapeDtypeStruct((T * B, F), jnp.float32),
        in_specs=[vmem, vmem, vmem],
        out_specs=vmem,
        scratch_shapes=[pltpu.VMEM((B, K), jnp.float32)],   # per-step LHS assembly
    )(x_flat, rhs, bias)

    return jnp.transpose(out_flat.reshape(T, B, F), (1, 0, 2))


def lstm_autoencoder_reference(x, enc_params, dec_params):
    """Pure-JAX reference (lax.scan) matching PyTorch LSTM semantics."""
    def run(seq_tm, params, H):
        B = seq_tm.shape[1]
        def step(carry, x_t):
            h, c = carry
            gates = x_t @ params["wih"] + h @ params["whh"] + params["b"]
            i = jax.nn.sigmoid(gates[:, 0 * H:1 * H])
            f = jax.nn.sigmoid(gates[:, 1 * H:2 * H])
            g = jnp.tanh(gates[:, 2 * H:3 * H])
            o = jax.nn.sigmoid(gates[:, 3 * H:4 * H])
            c = f * c + i * g
            h = o * jnp.tanh(c)
            return (h, c), h
        h0 = jnp.zeros((B, H), jnp.float32)
        c0 = jnp.zeros((B, H), jnp.float32)
        _, out = lax.scan(step, (h0, c0), seq_tm)
        return out
    x_tm = jnp.transpose(x, (1, 0, 2))
    He = enc_params["whh"].shape[0]
    F = dec_params["whh"].shape[0]
    enc_out = run(x_tm, enc_params, He)
    dec_out = run(enc_out, dec_params, F)
    return jnp.transpose(dec_out, (1, 0, 2))


if __name__ == "__main__":
    # Small shapes consistent with the module: batch=2, seq=8, n_features=4, embedding=32
    B, T, n_features, embedding_dim = 2, 8, 4, 32

    key = jax.random.PRNGKey(0)
    k_x, k_enc, k_dec = jax.random.split(key, 3)

    x = jax.random.normal(k_x, (B, T, n_features), jnp.float32)
    enc_params = init_lstm_params(k_enc, n_features, embedding_dim)   # encoder LSTM
    dec_params = init_lstm_params(k_dec, embedding_dim, n_features)   # decoder LSTM

    fused = prepare_fused_params(enc_params, dec_params)              # one-time prep

    y = lstm_autoencoder_forward(x, fused)
    y = jax.block_until_ready(y)

    y_ref = lstm_autoencoder_reference(x, enc_params, dec_params)
    assert y.shape == (B, T, n_features)
    assert jnp.allclose(y, y_ref, atol=2e-5, rtol=1e-5), "mismatch vs reference"

    print("KERNEL_OK")
</pallas_src>

<mosaic_0001>
module attributes {stable_mosaic.version = 11 : i64} {
  func.func @kernel(%arg0: memref<16x4xf32, #tpu.memory_space<vmem>>, %arg1: memref<40x144xf32, #tpu.memory_space<vmem>>, %arg2: memref<1x144xf32, #tpu.memory_space<vmem>>, %arg3: memref<16x4xf32, #tpu.memory_space<vmem>>, %arg4: memref<2x40xf32, #tpu.memory_space<vmem>>) attributes {dimension_semantics = [], scalar_prefetch = 0 : i64, scratch_operands = 1 : i64, tpu.core_type = #tpu.core_type<tc>} {
    %c0 = arith.constant 0 : index
    %c0_0 = arith.constant 0 : index
    %0 = vector.load %arg1[%c0, %c0_0] : memref<40x144xf32, #tpu.memory_space<vmem>>, vector<40x144xf32>
    %c0_1 = arith.constant 0 : index
    %c0_2 = arith.constant 0 : index
    %1 = vector.load %arg2[%c0_1, %c0_2] : memref<1x144xf32, #tpu.memory_space<vmem>>, vector<1x144xf32>
    %2 = vector.shape_cast %1 : vector<1x144xf32> to vector<1x144xf32>
    %3 = vector.broadcast %2 : vector<1x144xf32> to vector<2x144xf32>
    %cst = arith.constant 0.000000e+00 : f32
    %4 = vector.broadcast %cst : f32 to vector<2x32xf32>
    %cst_3 = arith.constant 0.000000e+00 : f32
    %5 = vector.broadcast %cst_3 : f32 to vector<2x4xf32>
    %c0_4 = arith.constant 0 : index
    %c0_5 = arith.constant 0 : index
    %6 = vector.load %arg0[%c0_4, %c0_5] : memref<16x4xf32, #tpu.memory_space<vmem>>, vector<2x4xf32>
    %c0_6 = arith.constant 0 : index
    %c0_7 = arith.constant 0 : index
    %7 = vector.load %arg4[%c0_6, %c0_7] : memref<2x40xf32, #tpu.memory_space<vmem>>, vector<2x32xf32>
    tpu.vector_store %arg4[%c0_6, %c0_7], %4 {strides = array<i32>} : memref<2x40xf32, #tpu.memory_space<vmem>>, vector<2x32xf32>,
    %c0_8 = arith.constant 0 : index
    %c32 = arith.constant 32 : index
    %8 = vector.load %arg4[%c0_8, %c32] : memref<2x40xf32, #tpu.memory_space<vmem>>, vector<2x4xf32>
    tpu.vector_store %arg4[%c0_8, %c32], %5 {strides = array<i32>} : memref<2x40xf32, #tpu.memory_space<vmem>>, vector<2x4xf32>,
    %c0_9 = arith.constant 0 : index
    %c36 = arith.constant 36 : index
    %9 = vector.load %arg4[%c0_9, %c36] : memref<2x40xf32, #tpu.memory_space<vmem>>, vector<2x4xf32>
    tpu.vector_store %arg4[%c0_9, %c36], %6 {strides = array<i32>} : memref<2x40xf32, #tpu.memory_space<vmem>>, vector<2x4xf32>,
    %c0_10 = arith.constant 0 : index
    %c0_11 = arith.constant 0 : index
    %10 = vector.load %arg4[%c0_10, %c0_11] : memref<2x40xf32, #tpu.memory_space<vmem>>, vector<2x40xf32>
    %cst_12 = arith.constant dense<0.000000e+00> : vector<2x144xf32>
    %11 = tpu.matmul %10, %0, %cst_12 {dimension_numbers = #tpu.dot_dimension_numbers<[1], [0], [0], [1], [0, 0, 1, 1], [], []>} : vector<2x40xf32>, vector<40x144xf32>, vector<2x144xf32> -> vector<2x144xf32>
    %12 = arith.addf %11, %3 : vector<2x144xf32>
    %13 = vector.extract_strided_slice %12 {offsets = [0, 0], sizes = [2, 128], strides = [1, 1]} : vector<2x144xf32> to vector<2x128xf32>
    %14 = arith.negf %13 : vector<2x128xf32>
    %15 = math.exp %14 : vector<2x128xf32>
    %cst_13 = arith.constant 1.000000e+00 : f32
    %16 = vector.broadcast %cst_13 : f32 to vector<2x128xf32>
    %17 = arith.addf %16, %15 : vector<2x128xf32>
    %18 = arith.divf %16, %17 : vector<2x128xf32>
    %19 = math.tanh %13 : vector<2x128xf32>
    %20 = vector.extract_strided_slice %18 {offsets = [0, 0], sizes = [2, 32], strides = [1, 1]} : vector<2x128xf32> to vector<2x32xf32>
    %21 = vector.extract_strided_slice %18 {offsets = [0, 32], sizes = [2, 32], strides = [1, 1]} : vector<2x128xf32> to vector<2x32xf32>
    %22 = vector.extract_strided_slice %19 {offsets = [0, 64], sizes = [2, 32], strides = [1, 1]} : vector<2x128xf32> to vector<2x32xf32>
    %23 = vector.extract_strided_slice %18 {offsets = [0, 96], sizes = [2, 32], strides = [1, 1]} : vector<2x128xf32> to vector<2x32xf32>
    %24 = arith.mulf %21, %4 : vector<2x32xf32>
    %25 = arith.mulf %20, %22 : vector<2x32xf32>
    %26 = arith.addf %24, %25 : vector<2x32xf32>
    %27 = math.tanh %26 : vector<2x32xf32>
    %28 = arith.mulf %23, %27 : vector<2x32xf32>
    %c2 = arith.constant 2 : index
    %c0_14 = arith.constant 0 : index
    %29 = vector.load %arg0[%c2, %c0_14] : memref<16x4xf32, #tpu.memory_space<vmem>>, vector<2x4xf32>
    %c0_15 = arith.constant 0 : index
    %c0_16 = arith.constant 0 : index
    %30 = vector.load %arg4[%c0_15, %c0_16] : memref<2x40xf32, #tpu.memory_space<vmem>>, vector<2x32xf32>
    tpu.vector_store %arg4[%c0_15, %c0_16], %28 {strides = array<i32>} : memref<2x40xf32, #tpu.memory_space<vmem>>, vector<2x32xf32>,
    %c0_17 = arith.constant 0 : index
    %c32_18 = arith.constant 32 : index
    %31 = vector.load %arg4[%c0_17, %c32_18] : memref<2x40xf32, #tpu.memory_space<vmem>>, vector<2x4xf32>
    tpu.vector_store %arg4[%c0_17, %c32_18], %5 {strides = array<i32>} : memref<2x40xf32, #tpu.memory_space<vmem>>, vector<2x4xf32>,
    %c0_19 = arith.constant 0 : index
    %c36_20 = arith.constant 36 : index
    %32 = vector.load %arg4[%c0_19, %c36_20] : memref<2x40xf32, #tpu.memory_space<vmem>>, vector<2x4xf32>
    tpu.vector_store %arg4[%c0_19, %c36_20], %29 {strides = array<i32>} : memref<2x40xf32, #tpu.memory_space<vmem>>, vector<2x4xf32>,
    %c0_21 = arith.constant 0 : index
    %c0_22 = arith.constant 0 : index
    %33 = vector.load %arg4[%c0_21, %c0_22] : memref<2x40xf32, #tpu.memory_space<vmem>>, vector<2x40xf32>
    %cst_23 = arith.constant dense<0.000000e+00> : vector<2x144xf32>
    %34 = tpu.matmul %33, %0, %cst_23 {dimension_numbers = #tpu.dot_dimension_numbers<[1], [0], [0], [1], [0, 0, 1, 1], [], []>} : vector<2x40xf32>, vector<40x144xf32>, vector<2x144xf32> -> vector<2x144xf32>
    %35 = arith.addf %34, %3 : vector<2x144xf32>
    %36 = vector.extract_strided_slice %35 {offsets = [0, 0], sizes = [2, 128], strides = [1, 1]} : vector<2x144xf32> to vector<2x128xf32>
    %37 = vector.extract_strided_slice %35 {offsets = [0, 128], sizes = [2, 16], strides = [1, 1]} : vector<2x144xf32> to vector<2x16xf32>
    %38 = arith.negf %37 : vector<2x16xf32>
    %39 = math.exp %38 : vector<2x16xf32>
    %cst_24 = arith.constant 1.000000e+00 : f32
    %40 = vector.broadcast %cst_24 : f32 to vector<2x16xf32>
    %41 = arith.addf %40, %39 : vector<2x16xf32>
    %42 = arith.divf %40, %41 : vector<2x16xf32>
    %43 = math.tanh %37 : vector<2x16xf32>
    %44 = vector.extract_strided_slice %42 {offsets = [0, 0], sizes = [2, 4], strides = [1, 1]} : vector<2x16xf32> to vector<2x4xf32>
    %45 = vector.extract_strided_slice %42 {offsets = [0, 4], sizes = [2, 4], strides = [1, 1]} : vector<2x16xf32> to vector<2x4xf32>
    %46 = vector.extract_strided_slice %43 {offsets = [0, 8], sizes = [2, 4], strides = [1, 1]} : vector<2x16xf32> to vector<2x4xf32>
    %47 = vector.extract_strided_slice %42 {offsets = [0, 12], sizes = [2, 4], strides = [1, 1]} : vector<2x16xf32> to vector<2x4xf32>
    %48 = arith.mulf %45, %5 : vector<2x4xf32>
    %49 = arith.mulf %44, %46 : vector<2x4xf32>
    %50 = arith.addf %48, %49 : vector<2x4xf32>
    %51 = math.tanh %50 : vector<2x4xf32>
    %52 = arith.mulf %47, %51 : vector<2x4xf32>
    %c0_25 = arith.constant 0 : index
    %c0_26 = arith.constant 0 : index
    %53 = vector.load %arg3[%c0_25, %c0_26] : memref<16x4xf32, #tpu.memory_space<vmem>>, vector<2x4xf32>
    tpu.vector_store %arg3[%c0_25, %c0_26], %52 {strides = array<i32>} : memref<16x4xf32, #tpu.memory_space<vmem>>, vector<2x4xf32>,
    %54 = arith.negf %36 : vector<2x128xf32>
    %55 = math.exp %54 : vector<2x128xf32>
    %cst_27 = arith.constant 1.000000e+00 : f32
    %56 = vector.broadcast %cst_27 : f32 to vector<2x128xf32>
    %57 = arith.addf %56, %55 : vector<2x128xf32>
    %58 = arith.divf %56, %57 : vector<2x128xf32>
    %59 = math.tanh %36 : vector<2x128xf32>
    %60 = vector.extract_strided_slice %58 {offsets = [0, 0], sizes = [2, 32], strides = [1, 1]} : vector<2x128xf32> to vector<2x32xf32>
    %61 = vector.extract_strided_slice %58 {offsets = [0, 32], sizes = [2, 32], strides = [1, 1]} : vector<2x128xf32> to vector<2x32xf32>
    %62 = vector.extract_strided_slice %59 {offsets = [0, 64], sizes = [2, 32], strides = [1, 1]} : vector<2x128xf32> to vector<2x32xf32>
    %63 = vector.extract_strided_slice %58 {offsets = [0, 96], sizes = [2, 32], strides = [1, 1]} : vector<2x128xf32> to vector<2x32xf32>
    %64 = arith.mulf %61, %26 : vector<2x32xf32>
    %65 = arith.mulf %60, %62 : vector<2x32xf32>
    %66 = arith.addf %64, %65 : vector<2x32xf32>
    %67 = math.tanh %66 : vector<2x32xf32>
    %68 = arith.mulf %63, %67 : vector<2x32xf32>
    %c4 = arith.constant 4 : index
    %c0_28 = arith.constant 0 : index
    %69 = vector.load %arg0[%c4, %c0_28] : memref<16x4xf32, #tpu.memory_space<vmem>>, vector<2x4xf32>
    %c0_29 = arith.constant 0 : index
    %c0_30 = arith.constant 0 : index
    %70 = vector.load %arg4[%c0_29, %c0_30] : memref<2x40xf32, #tpu.memory_space<vmem>>, vector<2x32xf32>
    tpu.vector_store %arg4[%c0_29, %c0_30], %68 {strides = array<i32>} : memref<2x40xf32, #tpu.memory_space<vmem>>, vector<2x32xf32>,
    %c0_31 = arith.constant 0 : index
    %c32_32 = arith.constant 32 : index
    %71 = vector.load %arg4[%c0_31, %c32_32] : memref<2x40xf32, #tpu.memory_space<vmem>>, vector<2x4xf32>
    tpu.vector_store %arg4[%c0_31, %c32_32], %52 {strides = array<i32>} : memref<2x40xf32, #tpu.memory_space<vmem>>, vector<2x4xf32>,
    %c0_33 = arith.constant 0 : index
    %c36_34 = arith.constant 36 : index
    %72 = vector.load %arg4[%c0_33, %c36_34] : memref<2x40xf32, #tpu.memory_space<vmem>>, vector<2x4xf32>
    tpu.vector_store %arg4[%c0_33, %c36_34], %69 {strides = array<i32>} : memref<2x40xf32, #tpu.memory_space<vmem>>, vector<2x4xf32>,
    %c0_35 = arith.constant 0 : index
    %c0_36 = arith.constant 0 : index
    %73 = vector.load %arg4[%c0_35, %c0_36] : memref<2x40xf32, #tpu.memory_space<vmem>>, vector<2x40xf32>
    %cst_37 = arith.constant dense<0.000000e+00> : vector<2x144xf32>
    %74 = tpu.matmul %73, %0, %cst_37 {dimension_numbers = #tpu.dot_dimension_numbers<[1], [0], [0], [1], [0, 0, 1, 1], [], []>} : vector<2x40xf32>, vector<40x144xf32>, vector<2x144xf32> -> vector<2x144xf32>
    %75 = arith.addf %74, %3 : vector<2x144xf32>
    %76 = vector.extract_strided_slice %75 {offsets = [0, 0], sizes = [2, 128], strides = [1, 1]} : vector<2x144xf32> to vector<2x128xf32>
    %77 = vector.extract_strided_slice %75 {offsets = [0, 128], sizes = [2, 16], strides = [1, 1]} : vector<2x144xf32> to vector<2x16xf32>
    %78 = arith.negf %77 : vector<2x16xf32>
    %79 = math.exp %78 : vector<2x16xf32>
    %cst_38 = arith.constant 1.000000e+00 : f32
    %80 = vector.broadcast %cst_38 : f32 to vector<2x16xf32>
    %81 = arith.addf %80, %79 : vector<2x16xf32>
    %82 = arith.divf %80, %81 : vector<2x16xf32>
    %83 = math.tanh %77 : vector<2x16xf32>
    %84 = vector.extract_strided_slice %82 {offsets = [0, 0], sizes = [2, 4], strides = [1, 1]} : vector<2x16xf32> to vector<2x4xf32>
    %85 = vector.extract_strided_slice %82 {offsets = [0, 4], sizes = [2, 4], strides = [1, 1]} : vector<2x16xf32> to vector<2x4xf32>
    %86 = vector.extract_strided_slice %83 {offsets = [0, 8], sizes = [2, 4], strides = [1, 1]} : vector<2x16xf32> to vector<2x4xf32>
    %87 = vector.extract_strided_slice %82 {offsets = [0, 12], sizes = [2, 4], strides = [1, 1]} : vector<2x16xf32> to vector<2x4xf32>
    %88 = arith.mulf %85, %50 : vector<2x4xf32>
    %89 = arith.mulf %84, %86 : vector<2x4xf32>
    %90 = arith.addf %88, %89 : vector<2x4xf32>
    %91 = math.tanh %90 : vector<2x4xf32>
    %92 = arith.mulf %87, %91 : vector<2x4xf32>
    %c2_39 = arith.constant 2 : index
    %c0_40 = arith.constant 0 : index
    %93 = vector.load %arg3[%c2_39, %c0_40] : memref<16x4xf32, #tpu.memory_space<vmem>>, vector<2x4xf32>
    tpu.vector_store %arg3[%c2_39, %c0_40], %92 {strides = array<i32>} : memref<16x4xf32, #tpu.memory_space<vmem>>, vector<2x4xf32>,
    %94 = arith.negf %76 : vector<2x128xf32>
    %95 = math.exp %94 : vector<2x128xf32>
    %cst_41 = arith.constant 1.000000e+00 : f32
    %96 = vector.broadcast %cst_41 : f32 to vector<2x128xf32>
    %97 = arith.addf %96, %95 : vector<2x128xf32>
    %98 = arith.divf %96, %97 : vector<2x128xf32>
    %99 = math.tanh %76 : vector<2x128xf32>
    %100 = vector.extract_strided_slice %98 {offsets = [0, 0], sizes = [2, 32], strides = [1, 1]} : vector<2x128xf32> to vector<2x32xf32>
    %101 = vector.extract_strided_slice %98 {offsets = [0, 32], sizes = [2, 32], strides = [1, 1]} : vector<2x128xf32> to vector<2x32xf32>
    %102 = vector.extract_strided_slice %99 {offsets = [0, 64], sizes = [2, 32], strides = [1, 1]} : vector<2x128xf32> to vector<2x32xf32>
    %103 = vector.extract_strided_slice %98 {offsets = [0, 96], sizes = [2, 32], strides = [1, 1]} : vector<2x128xf32> to vector<2x32xf32>
    %104 = arith.mulf %101, %66 : vector<2x32xf32>
    %105 = arith.mulf %100, %102 : vector<2x32xf32>
    %106 = arith.addf %104, %105 : vector<2x32xf32>
    %107 = math.tanh %106 : vector<2x32xf32>
    %108 = arith.mulf %103, %107 : vector<2x32xf32>
    %c6 = arith.constant 6 : index
    %c0_42 = arith.constant 0 : index
    %109 = vector.load %arg0[%c6, %c0_42] : memref<16x4xf32, #tpu.memory_space<vmem>>, vector<2x4xf32>
    %c0_43 = arith.constant 0 : index
    %c0_44 = arith.constant 0 : index
    %110 = vector.load %arg4[%c0_43, %c0_44] : memref<2x40xf32, #tpu.memory_space<vmem>>, vector<2x32xf32>
    tpu.vector_store %arg4[%c0_43, %c0_44], %108 {strides = array<i32>} : memref<2x40xf32, #tpu.memory_space<vmem>>, vector<2x32xf32>,
    %c0_45 = arith.constant 0 : index
    %c32_46 = arith.constant 32 : index
    %111 = vector.load %arg4[%c0_45, %c32_46] : memref<2x40xf32, #tpu.memory_space<vmem>>, vector<2x4xf32>
    tpu.vector_store %arg4[%c0_45, %c32_46], %92 {strides = array<i32>} : memref<2x40xf32, #tpu.memory_space<vmem>>, vector<2x4xf32>,
    %c0_47 = arith.constant 0 : index
    %c36_48 = arith.constant 36 : index
    %112 = vector.load %arg4[%c0_47, %c36_48] : memref<2x40xf32, #tpu.memory_space<vmem>>, vector<2x4xf32>
    tpu.vector_store %arg4[%c0_47, %c36_48], %109 {strides = array<i32>} : memref<2x40xf32, #tpu.memory_space<vmem>>, vector<2x4xf32>,
    %c0_49 = arith.constant 0 : index
    %c0_50 = arith.constant 0 : index
    %113 = vector.load %arg4[%c0_49, %c0_50] : memref<2x40xf32, #tpu.memory_space<vmem>>, vector<2x40xf32>
    %cst_51 = arith.constant dense<0.000000e+00> : vector<2x144xf32>
    %114 = tpu.matmul %113, %0, %cst_51 {dimension_numbers = #tpu.dot_dimension_numbers<[1], [0], [0], [1], [0, 0, 1, 1], [], []>} : vector<2x40xf32>, vector<40x144xf32>, vector<2x144xf32> -> vector<2x144xf32>
    %115 = arith.addf %114, %3 : vector<2x144xf32>
    %116 = vector.extract_strided_slice %115 {offsets = [0, 0], sizes = [2, 128], strides = [1, 1]} : vector<2x144xf32> to vector<2x128xf32>
    %117 = vector.extract_strided_slice %115 {offsets = [0, 128], sizes = [2, 16], strides = [1, 1]} : vector<2x144xf32> to vector<2x16xf32>
    %118 = arith.negf %117 : vector<2x16xf32>
    %119 = math.exp %118 : vector<2x16xf32>
    %cst_52 = arith.constant 1.000000e+00 : f32
    %120 = vector.broadcast %cst_52 : f32 to vector<2x16xf32>
    %121 = arith.addf %120, %119 : vector<2x16xf32>
    %122 = arith.divf %120, %121 : vector<2x16xf32>
    %123 = math.tanh %117 : vector<2x16xf32>
    %124 = vector.extract_strided_slice %122 {offsets = [0, 0], sizes = [2, 4], strides = [1, 1]} : vector<2x16xf32> to vector<2x4xf32>
    %125 = vector.extract_strided_slice %122 {offsets = [0, 4], sizes = [2, 4], strides = [1, 1]} : vector<2x16xf32> to vector<2x4xf32>
    %126 = vector.extract_strided_slice %123 {offsets = [0, 8], sizes = [2, 4], strides = [1, 1]} : vector<2x16xf32> to vector<2x4xf32>
    %127 = vector.extract_strided_slice %122 {offsets = [0, 12], sizes = [2, 4], strides = [1, 1]} : vector<2x16xf32> to vector<2x4xf32>
    %128 = arith.mulf %125, %90 : vector<2x4xf32>
    %129 = arith.mulf %124, %126 : vector<2x4xf32>
    %130 = arith.addf %128, %129 : vector<2x4xf32>
    %131 = math.tanh %130 : vector<2x4xf32>
    %132 = arith.mulf %127, %131 : vector<2x4xf32>
    %c4_53 = arith.constant 4 : index
    %c0_54 = arith.constant 0 : index
    %133 = vector.load %arg3[%c4_53, %c0_54] : memref<16x4xf32, #tpu.memory_space<vmem>>, vector<2x4xf32>
    tpu.vector_store %arg3[%c4_53, %c0_54], %132 {strides = array<i32>} : memref<16x4xf32, #tpu.memory_space<vmem>>, vector<2x4xf32>,
    %134 = arith.negf %116 : vector<2x128xf32>
    %135 = math.exp %134 : vector<2x128xf32>
    %cst_55 = arith.constant 1.000000e+00 : f32
    %136 = vector.broadcast %cst_55 : f32 to vector<2x128xf32>
    %137 = arith.addf %136, %135 : vector<2x128xf32>
    %138 = arith.divf %136, %137 : vector<2x128xf32>
    %139 = math.tanh %116 : vector<2x128xf32>
    %140 = vector.extract_strided_slice %138 {offsets = [0, 0], sizes = [2, 32], strides = [1, 1]} : vector<2x128xf32> to vector<2x32xf32>
    %141 = vector.extract_strided_slice %138 {offsets = [0, 32], sizes = [2, 32], strides = [1, 1]} : vector<2x128xf32> to vector<2x32xf32>
    %142 = vector.extract_strided_slice %139 {offsets = [0, 64], sizes = [2, 32], strides = [1, 1]} : vector<2x128xf32> to vector<2x32xf32>
    %143 = vector.extract_strided_slice %138 {offsets = [0, 96], sizes = [2, 32], strides = [1, 1]} : vector<2x128xf32> to vector<2x32xf32>
    %144 = arith.mulf %141, %106 : vector<2x32xf32>
    %145 = arith.mulf %140, %142 : vector<2x32xf32>
    %146 = arith.addf %144, %145 : vector<2x32xf32>
    %147 = math.tanh %146 : vector<2x32xf32>
    %148 = arith.mulf %143, %147 : vector<2x32xf32>
    %c8 = arith.constant 8 : index
    %c0_56 = arith.constant 0 : index
    %149 = vector.load %arg0[%c8, %c0_56] : memref<16x4xf32, #tpu.memory_space<vmem>>, vector<2x4xf32>
    %c0_57 = arith.constant 0 : index
    %c0_58 = arith.constant 0 : index
    %150 = vector.load %arg4[%c0_57, %c0_58] : memref<2x40xf32, #tpu.memory_space<vmem>>, vector<2x32xf32>
    tpu.vector_store %arg4[%c0_57, %c0_58], %148 {strides = array<i32>} : memref<2x40xf32, #tpu.memory_space<vmem>>, vector<2x32xf32>,
    %c0_59 = arith.constant 0 : index
    %c32_60 = arith.constant 32 : index
    %151 = vector.load %arg4[%c0_59, %c32_60] : memref<2x40xf32, #tpu.memory_space<vmem>>, vector<2x4xf32>
    tpu.vector_store %arg4[%c0_59, %c32_60], %132 {strides = array<i32>} : memref<2x40xf32, #tpu.memory_space<vmem>>, vector<2x4xf32>,
    %c0_61 = arith.constant 0 : index
    %c36_62 = arith.constant 36 : index
    %152 = vector.load %arg4[%c0_61, %c36_62] : memref<2x40xf32, #tpu.memory_space<vmem>>, vector<2x4xf32>
    tpu.vector_store %arg4[%c0_61, %c36_62], %149 {strides = array<i32>} : memref<2x40xf32, #tpu.memory_space<vmem>>, vector<2x4xf32>,
    %c0_63 = arith.constant 0 : index
    %c0_64 = arith.constant 0 : index
    %153 = vector.load %arg4[%c0_63, %c0_64] : memref<2x40xf32, #tpu.memory_space<vmem>>, vector<2x40xf32>
    %cst_65 = arith.constant dense<0.000000e+00> : vector<2x144xf32>
    %154 = tpu.matmul %153, %0, %cst_65 {dimension_numbers = #tpu.dot_dimension_numbers<[1], [0], [0], [1], [0, 0, 1, 1], [], []>} : vector<2x40xf32>, vector<40x144xf32>, vector<2x144xf32> -> vector<2x144xf32>
    %155 = arith.addf %154, %3 : vector<2x144xf32>
    %156 = vector.extract_strided_slice %155 {offsets = [0, 0], sizes = [2, 128], strides = [1, 1]} : vector<2x144xf32> to vector<2x128xf32>
    %157 = vector.extract_strided_slice %155 {offsets = [0, 128], sizes = [2, 16], strides = [1, 1]} : vector<2x144xf32> to vector<2x16xf32>
    %158 = arith.negf %157 : vector<2x16xf32>
    %159 = math.exp %158 : vector<2x16xf32>
    %cst_66 = arith.constant 1.000000e+00 : f32
    %160 = vector.broadcast %cst_66 : f32 to vector<2x16xf32>
    %161 = arith.addf %160, %159 : vector<2x16xf32>
    %162 = arith.divf %160, %161 : vector<2x16xf32>
    %163 = math.tanh %157 : vector<2x16xf32>
    %164 = vector.extract_strided_slice %162 {offsets = [0, 0], sizes = [2, 4], strides = [1, 1]} : vector<2x16xf32> to vector<2x4xf32>
    %165 = vector.extract_strided_slice %162 {offsets = [0, 4], sizes = [2, 4], strides = [1, 1]} : vector<2x16xf32> to vector<2x4xf32>
    %166 = vector.extract_strided_slice %163 {offsets = [0, 8], sizes = [2, 4], strides = [1, 1]} : vector<2x16xf32> to vector<2x4xf32>
    %167 = vector.extract_strided_slice %162 {offsets = [0, 12], sizes = [2, 4], strides = [1, 1]} : vector<2x16xf32> to vector<2x4xf32>
    %168 = arith.mulf %165, %130 : vector<2x4xf32>
    %169 = arith.mulf %164, %166 : vector<2x4xf32>
    %170 = arith.addf %168, %169 : vector<2x4xf32>
    %171 = math.tanh %170 : vector<2x4xf32>
    %172 = arith.mulf %167, %171 : vector<2x4xf32>
    %c6_67 = arith.constant 6 : index
    %c0_68 = arith.constant 0 : index
    %173 = vector.load %arg3[%c6_67, %c0_68] : memref<16x4xf32, #tpu.memory_space<vmem>>, vector<2x4xf32>
    tpu.vector_store %arg3[%c6_67, %c0_68], %172 {strides = array<i32>} : memref<16x4xf32, #tpu.memory_space<vmem>>, vector<2x4xf32>,
    %174 = arith.negf %156 : vector<2x128xf32>
    %175 = math.exp %174 : vector<2x128xf32>
    %cst_69 = arith.constant 1.000000e+00 : f32
    %176 = vector.broadcast %cst_69 : f32 to vector<2x128xf32>
    %177 = arith.addf %176, %175 : vector<2x128xf32>
    %178 = arith.divf %176, %177 : vector<2x128xf32>
    %179 = math.tanh %156 : vector<2x128xf32>
    %180 = vector.extract_strided_slice %178 {offsets = [0, 0], sizes = [2, 32], strides = [1, 1]} : vector<2x128xf32> to vector<2x32xf32>
    %181 = vector.extract_strided_slice %178 {offsets = [0, 32], sizes = [2, 32], strides = [1, 1]} : vector<2x128xf32> to vector<2x32xf32>
    %182 = vector.extract_strided_slice %179 {offsets = [0, 64], sizes = [2, 32], strides = [1, 1]} : vector<2x128xf32> to vector<2x32xf32>
    %183 = vector.extract_strided_slice %178 {offsets = [0, 96], sizes = [2, 32], strides = [1, 1]} : vector<2x128xf32> to vector<2x32xf32>
    %184 = arith.mulf %181, %146 : vector<2x32xf32>
    %185 = arith.mulf %180, %182 : vector<2x32xf32>
    %186 = arith.addf %184, %185 : vector<2x32xf32>
    %187 = math.tanh %186 : vector<2x32xf32>
    %188 = arith.mulf %183, %187 : vector<2x32xf32>
    %c10 = arith.constant 10 : index
    %c0_70 = arith.constant 0 : index
    %189 = vector.load %arg0[%c10, %c0_70] : memref<16x4xf32, #tpu.memory_space<vmem>>, vector<2x4xf32>
    %c0_71 = arith.constant 0 : index
    %c0_72 = arith.constant 0 : index
    %190 = vector.load %arg4[%c0_71, %c0_72] : memref<2x40xf32, #tpu.memory_space<vmem>>, vector<2x32xf32>
    tpu.vector_store %arg4[%c0_71, %c0_72], %188 {strides = array<i32>} : memref<2x40xf32, #tpu.memory_space<vmem>>, vector<2x32xf32>,
    %c0_73 = arith.constant 0 : index
    %c32_74 = arith.constant 32 : index
    %191 = vector.load %arg4[%c0_73, %c32_74] : memref<2x40xf32, #tpu.memory_space<vmem>>, vector<2x4xf32>
    tpu.vector_store %arg4[%c0_73, %c32_74], %172 {strides = array<i32>} : memref<2x40xf32, #tpu.memory_space<vmem>>, vector<2x4xf32>,
    %c0_75 = arith.constant 0 : index
    %c36_76 = arith.constant 36 : index
    %192 = vector.load %arg4[%c0_75, %c36_76] : memref<2x40xf32, #tpu.memory_space<vmem>>, vector<2x4xf32>
    tpu.vector_store %arg4[%c0_75, %c36_76], %189 {strides = array<i32>} : memref<2x40xf32, #tpu.memory_space<vmem>>, vector<2x4xf32>,
    %c0_77 = arith.constant 0 : index
    %c0_78 = arith.constant 0 : index
    %193 = vector.load %arg4[%c0_77, %c0_78] : memref<2x40xf32, #tpu.memory_space<vmem>>, vector<2x40xf32>
    %cst_79 = arith.constant dense<0.000000e+00> : vector<2x144xf32>
    %194 = tpu.matmul %193, %0, %cst_79 {dimension_numbers = #tpu.dot_dimension_numbers<[1], [0], [0], [1], [0, 0, 1, 1], [], []>} : vector<2x40xf32>, vector<40x144xf32>, vector<2x144xf32> -> vector<2x144xf32>
    %195 = arith.addf %194, %3 : vector<2x144xf32>
    %196 = vector.extract_strided_slice %195 {offsets = [0, 0], sizes = [2, 128], strides = [1, 1]} : vector<2x144xf32> to vector<2x128xf32>
    %197 = vector.extract_strided_slice %195 {offsets = [0, 128], sizes = [2, 16], strides = [1, 1]} : vector<2x144xf32> to vector<2x16xf32>
    %198 = arith.negf %197 : vector<2x16xf32>
    %199 = math.exp %198 : vector<2x16xf32>
    %cst_80 = arith.constant 1.000000e+00 : f32
    %200 = vector.broadcast %cst_80 : f32 to vector<2x16xf32>
    %201 = arith.addf %200, %199 : vector<2x16xf32>
    %202 = arith.divf %200, %201 : vector<2x16xf32>
    %203 = math.tanh %197 : vector<2x16xf32>
    %204 = vector.extract_strided_slice %202 {offsets = [0, 0], sizes = [2, 4], strides = [1, 1]} : vector<2x16xf32> to vector<2x4xf32>
    %205 = vector.extract_strided_slice %202 {offsets = [0, 4], sizes = [2, 4], strides = [1, 1]} : vector<2x16xf32> to vector<2x4xf32>
    %206 = vector.extract_strided_slice %203 {offsets = [0, 8], sizes = [2, 4], strides = [1, 1]} : vector<2x16xf32> to vector<2x4xf32>
    %207 = vector.extract_strided_slice %202 {offsets = [0, 12], sizes = [2, 4], strides = [1, 1]} : vector<2x16xf32> to vector<2x4xf32>
    %208 = arith.mulf %205, %170 : vector<2x4xf32>
    %209 = arith.mulf %204, %206 : vector<2x4xf32>
    %210 = arith.addf %208, %209 : vector<2x4xf32>
    %211 = math.tanh %210 : vector<2x4xf32>
    %212 = arith.mulf %207, %211 : vector<2x4xf32>
    %c8_81 = arith.constant 8 : index
    %c0_82 = arith.constant 0 : index
    %213 = vector.load %arg3[%c8_81, %c0_82] : memref<16x4xf32, #tpu.memory_space<vmem>>, vector<2x4xf32>
    tpu.vector_store %arg3[%c8_81, %c0_82], %212 {strides = array<i32>} : memref<16x4xf32, #tpu.memory_space<vmem>>, vector<2x4xf32>,
    %214 = arith.negf %196 : vector<2x128xf32>
    %215 = math.exp %214 : vector<2x128xf32>
    %cst_83 = arith.constant 1.000000e+00 : f32
    %216 = vector.broadcast %cst_83 : f32 to vector<2x128xf32>
    %217 = arith.addf %216, %215 : vector<2x128xf32>
    %218 = arith.divf %216, %217 : vector<2x128xf32>
    %219 = math.tanh %196 : vector<2x128xf32>
    %220 = vector.extract_strided_slice %218 {offsets = [0, 0], sizes = [2, 32], strides = [1, 1]} : vector<2x128xf32> to vector<2x32xf32>
    %221 = vector.extract_strided_slice %218 {offsets = [0, 32], sizes = [2, 32], strides = [1, 1]} : vector<2x128xf32> to vector<2x32xf32>
    %222 = vector.extract_strided_slice %219 {offsets = [0, 64], sizes = [2, 32], strides = [1, 1]} : vector<2x128xf32> to vector<2x32xf32>
    %223 = vector.extract_strided_slice %218 {offsets = [0, 96], sizes = [2, 32], strides = [1, 1]} : vector<2x128xf32> to vector<2x32xf32>
    %224 = arith.mulf %221, %186 : vector<2x32xf32>
    %225 = arith.mulf %220, %222 : vector<2x32xf32>
    %226 = arith.addf %224, %225 : vector<2x32xf32>
    %227 = math.tanh %226 : vector<2x32xf32>
    %228 = arith.mulf %223, %227 : vector<2x32xf32>
    %c12 = arith.constant 12 : index
    %c0_84 = arith.constant 0 : index
    %229 = vector.load %arg0[%c12, %c0_84] : memref<16x4xf32, #tpu.memory_space<vmem>>, vector<2x4xf32>
    %c0_85 = arith.constant 0 : index
    %c0_86 = arith.constant 0 : index
    %230 = vector.load %arg4[%c0_85, %c0_86] : memref<2x40xf32, #tpu.memory_space<vmem>>, vector<2x32xf32>
    tpu.vector_store %arg4[%c0_85, %c0_86], %228 {strides = array<i32>} : memref<2x40xf32, #tpu.memory_space<vmem>>, vector<2x32xf32>,
    %c0_87 = arith.constant 0 : index
    %c32_88 = arith.constant 32 : index
    %231 = vector.load %arg4[%c0_87, %c32_88] : memref<2x40xf32, #tpu.memory_space<vmem>>, vector<2x4xf32>
    tpu.vector_store %arg4[%c0_87, %c32_88], %212 {strides = array<i32>} : memref<2x40xf32, #tpu.memory_space<vmem>>, vector<2x4xf32>,
    %c0_89 = arith.constant 0 : index
    %c36_90 = arith.constant 36 : index
    %232 = vector.load %arg4[%c0_89, %c36_90] : memref<2x40xf32, #tpu.memory_space<vmem>>, vector<2x4xf32>
    tpu.vector_store %arg4[%c0_89, %c36_90], %229 {strides = array<i32>} : memref<2x40xf32, #tpu.memory_space<vmem>>, vector<2x4xf32>,
    %c0_91 = arith.constant 0 : index
    %c0_92 = arith.constant 0 : index
    %233 = vector.load %arg4[%c0_91, %c0_92] : memref<2x40xf32, #tpu.memory_space<vmem>>, vector<2x40xf32>
    %cst_93 = arith.constant dense<0.000000e+00> : vector<2x144xf32>
    %234 = tpu.matmul %233, %0, %cst_93 {dimension_numbers = #tpu.dot_dimension_numbers<[1], [0], [0], [1], [0, 0, 1, 1], [], []>} : vector<2x40xf32>, vector<40x144xf32>, vector<2x144xf32> -> vector<2x144xf32>
    %235 = arith.addf %234, %3 : vector<2x144xf32>
    %236 = vector.extract_strided_slice %235 {offsets = [0, 0], sizes = [2, 128], strides = [1, 1]} : vector<2x144xf32> to vector<2x128xf32>
    %237 = vector.extract_strided_slice %235 {offsets = [0, 128], sizes = [2, 16], strides = [1, 1]} : vector<2x144xf32> to vector<2x16xf32>
    %238 = arith.negf %237 : vector<2x16xf32>
    %239 = math.exp %238 : vector<2x16xf32>
    %cst_94 = arith.constant 1.000000e+00 : f32
    %240 = vector.broadcast %cst_94 : f32 to vector<2x16xf32>
    %241 = arith.addf %240, %239 : vector<2x16xf32>
    %242 = arith.divf %240, %241 : vector<2x16xf32>
    %243 = math.tanh %237 : vector<2x16xf32>
    %244 = vector.extract_strided_slice %242 {offsets = [0, 0], sizes = [2, 4], strides = [1, 1]} : vector<2x16xf32> to vector<2x4xf32>
    %245 = vector.extract_strided_slice %242 {offsets = [0, 4], sizes = [2, 4], strides = [1, 1]} : vector<2x16xf32> to vector<2x4xf32>
    %246 = vector.extract_strided_slice %243 {offsets = [0, 8], sizes = [2, 4], strides = [1, 1]} : vector<2x16xf32> to vector<2x4xf32>
    %247 = vector.extract_strided_slice %242 {offsets = [0, 12], sizes = [2, 4], strides = [1, 1]} : vector<2x16xf32> to vector<2x4xf32>
    %248 = arith.mulf %245, %210 : vector<2x4xf32>
    %249 = arith.mulf %244, %246 : vector<2x4xf32>
    %250 = arith.addf %248, %249 : vector<2x4xf32>
    %251 = math.tanh %250 : vector<2x4xf32>
    %252 = arith.mulf %247, %251 : vector<2x4xf32>
    %c10_95 = arith.constant 10 : index
    %c0_96 = arith.constant 0 : index
    %253 = vector.load %arg3[%c10_95, %c0_96] : memref<16x4xf32, #tpu.memory_space<vmem>>, vector<2x4xf32>
    tpu.vector_store %arg3[%c10_95, %c0_96], %252 {strides = array<i32>} : memref<16x4xf32, #tpu.memory_space<vmem>>, vector<2x4xf32>,
    %254 = arith.negf %236 : vector<2x128xf32>
    %255 = math.exp %254 : vector<2x128xf32>
    %cst_97 = arith.constant 1.000000e+00 : f32
    %256 = vector.broadcast %cst_97 : f32 to vector<2x128xf32>
    %257 = arith.addf %256, %255 : vector<2x128xf32>
    %258 = arith.divf %256, %257 : vector<2x128xf32>
    %259 = math.tanh %236 : vector<2x128xf32>
    %260 = vector.extract_strided_slice %258 {offsets = [0, 0], sizes = [2, 32], strides = [1, 1]} : vector<2x128xf32> to vector<2x32xf32>
    %261 = vector.extract_strided_slice %258 {offsets = [0, 32], sizes = [2, 32], strides = [1, 1]} : vector<2x128xf32> to vector<2x32xf32>
    %262 = vector.extract_strided_slice %259 {offsets = [0, 64], sizes = [2, 32], strides = [1, 1]} : vector<2x128xf32> to vector<2x32xf32>
    %263 = vector.extract_strided_slice %258 {offsets = [0, 96], sizes = [2, 32], strides = [1, 1]} : vector<2x128xf32> to vector<2x32xf32>
    %264 = arith.mulf %261, %226 : vector<2x32xf32>
    %265 = arith.mulf %260, %262 : vector<2x32xf32>
    %266 = arith.addf %264, %265 : vector<2x32xf32>
    %267 = math.tanh %266 : vector<2x32xf32>
    %268 = arith.mulf %263, %267 : vector<2x32xf32>
    %c14 = arith.constant 14 : index
    %c0_98 = arith.constant 0 : index
    %269 = vector.load %arg0[%c14, %c0_98] : memref<16x4xf32, #tpu.memory_space<vmem>>, vector<2x4xf32>
    %c0_99 = arith.constant 0 : index
    %c0_100 = arith.constant 0 : index
    %270 = vector.load %arg4[%c0_99, %c0_100] : memref<2x40xf32, #tpu.memory_space<vmem>>, vector<2x32xf32>
    tpu.vector_store %arg4[%c0_99, %c0_100], %268 {strides = array<i32>} : memref<2x40xf32, #tpu.memory_space<vmem>>, vector<2x32xf32>,
    %c0_101 = arith.constant 0 : index
    %c32_102 = arith.constant 32 : index
    %271 = vector.load %arg4[%c0_101, %c32_102] : memref<2x40xf32, #tpu.memory_space<vmem>>, vector<2x4xf32>
    tpu.vector_store %arg4[%c0_101, %c32_102], %252 {strides = array<i32>} : memref<2x40xf32, #tpu.memory_space<vmem>>, vector<2x4xf32>,
    %c0_103 = arith.constant 0 : index
    %c36_104 = arith.constant 36 : index
    %272 = vector.load %arg4[%c0_103, %c36_104] : memref<2x40xf32, #tpu.memory_space<vmem>>, vector<2x4xf32>
    tpu.vector_store %arg4[%c0_103, %c36_104], %269 {strides = array<i32>} : memref<2x40xf32, #tpu.memory_space<vmem>>, vector<2x4xf32>,
    %c0_105 = arith.constant 0 : index
    %c0_106 = arith.constant 0 : index
    %273 = vector.load %arg4[%c0_105, %c0_106] : memref<2x40xf32, #tpu.memory_space<vmem>>, vector<2x40xf32>
    %cst_107 = arith.constant dense<0.000000e+00> : vector<2x144xf32>
    %274 = tpu.matmul %273, %0, %cst_107 {dimension_numbers = #tpu.dot_dimension_numbers<[1], [0], [0], [1], [0, 0, 1, 1], [], []>} : vector<2x40xf32>, vector<40x144xf32>, vector<2x144xf32> -> vector<2x144xf32>
    %275 = arith.addf %274, %3 : vector<2x144xf32>
    %276 = vector.extract_strided_slice %275 {offsets = [0, 0], sizes = [2, 128], strides = [1, 1]} : vector<2x144xf32> to vector<2x128xf32>
    %277 = vector.extract_strided_slice %275 {offsets = [0, 128], sizes = [2, 16], strides = [1, 1]} : vector<2x144xf32> to vector<2x16xf32>
    %278 = arith.negf %277 : vector<2x16xf32>
    %279 = math.exp %278 : vector<2x16xf32>
    %cst_108 = arith.constant 1.000000e+00 : f32
    %280 = vector.broadcast %cst_108 : f32 to vector<2x16xf32>
    %281 = arith.addf %280, %279 : vector<2x16xf32>
    %282 = arith.divf %280, %281 : vector<2x16xf32>
    %283 = math.tanh %277 : vector<2x16xf32>
    %284 = vector.extract_strided_slice %282 {offsets = [0, 0], sizes = [2, 4], strides = [1, 1]} : vector<2x16xf32> to vector<2x4xf32>
    %285 = vector.extract_strided_slice %282 {offsets = [0, 4], sizes = [2, 4], strides = [1, 1]} : vector<2x16xf32> to vector<2x4xf32>
    %286 = vector.extract_strided_slice %283 {offsets = [0, 8], sizes = [2, 4], strides = [1, 1]} : vector<2x16xf32> to vector<2x4xf32>
    %287 = vector.extract_strided_slice %282 {offsets = [0, 12], sizes = [2, 4], strides = [1, 1]} : vector<2x16xf32> to vector<2x4xf32>
    %288 = arith.mulf %285, %250 : vector<2x4xf32>
    %289 = arith.mulf %284, %286 : vector<2x4xf32>
    %290 = arith.addf %288, %289 : vector<2x4xf32>
    %291 = math.tanh %290 : vector<2x4xf32>
    %292 = arith.mulf %287, %291 : vector<2x4xf32>
    %c12_109 = arith.constant 12 : index
    %c0_110 = arith.constant 0 : index
    %293 = vector.load %arg3[%c12_109, %c0_110] : memref<16x4xf32, #tpu.memory_space<vmem>>, vector<2x4xf32>
    tpu.vector_store %arg3[%c12_109, %c0_110], %292 {strides = array<i32>} : memref<16x4xf32, #tpu.memory_space<vmem>>, vector<2x4xf32>,
    %294 = arith.negf %276 : vector<2x128xf32>
    %295 = math.exp %294 : vector<2x128xf32>
    %cst_111 = arith.constant 1.000000e+00 : f32
    %296 = vector.broadcast %cst_111 : f32 to vector<2x128xf32>
    %297 = arith.addf %296, %295 : vector<2x128xf32>
    %298 = arith.divf %296, %297 : vector<2x128xf32>
    %299 = math.tanh %276 : vector<2x128xf32>
    %300 = vector.extract_strided_slice %298 {offsets = [0, 0], sizes = [2, 32], strides = [1, 1]} : vector<2x128xf32> to vector<2x32xf32>
    %301 = vector.extract_strided_slice %298 {offsets = [0, 32], sizes = [2, 32], strides = [1, 1]} : vector<2x128xf32> to vector<2x32xf32>
    %302 = vector.extract_strided_slice %299 {offsets = [0, 64], sizes = [2, 32], strides = [1, 1]} : vector<2x128xf32> to vector<2x32xf32>
    %303 = vector.extract_strided_slice %298 {offsets = [0, 96], sizes = [2, 32], strides = [1, 1]} : vector<2x128xf32> to vector<2x32xf32>
    %304 = arith.mulf %301, %266 : vector<2x32xf32>
    %305 = arith.mulf %300, %302 : vector<2x32xf32>
    %306 = arith.addf %304, %305 : vector<2x32xf32>
    %307 = math.tanh %306 : vector<2x32xf32>
    %308 = arith.mulf %303, %307 : vector<2x32xf32>
    %c14_112 = arith.constant 14 : index
    %c0_113 = arith.constant 0 : index
    %309 = vector.load %arg0[%c14_112, %c0_113] : memref<16x4xf32, #tpu.memory_space<vmem>>, vector<2x4xf32>
    %c0_114 = arith.constant 0 : index
    %c0_115 = arith.constant 0 : index
    %310 = vector.load %arg4[%c0_114, %c0_115] : memref<2x40xf32, #tpu.memory_space<vmem>>, vector<2x32xf32>
    tpu.vector_store %arg4[%c0_114, %c0_115], %308 {strides = array<i32>} : memref<2x40xf32, #tpu.memory_space<vmem>>, vector<2x32xf32>,
    %c0_116 = arith.constant 0 : index
    %c32_117 = arith.constant 32 : index
    %311 = vector.load %arg4[%c0_116, %c32_117] : memref<2x40xf32, #tpu.memory_space<vmem>>, vector<2x4xf32>
    tpu.vector_store %arg4[%c0_116, %c32_117], %292 {strides = array<i32>} : memref<2x40xf32, #tpu.memory_space<vmem>>, vector<2x4xf32>,
    %c0_118 = arith.constant 0 : index
    %c36_119 = arith.constant 36 : index
    %312 = vector.load %arg4[%c0_118, %c36_119] : memref<2x40xf32, #tpu.memory_space<vmem>>, vector<2x4xf32>
    tpu.vector_store %arg4[%c0_118, %c36_119], %309 {strides = array<i32>} : memref<2x40xf32, #tpu.memory_space<vmem>>, vector<2x4xf32>,
    %c0_120 = arith.constant 0 : index
    %c0_121 = arith.constant 0 : index
    %313 = vector.load %arg4[%c0_120, %c0_121] : memref<2x40xf32, #tpu.memory_space<vmem>>, vector<2x40xf32>
    %cst_122 = arith.constant dense<0.000000e+00> : vector<2x144xf32>
    %314 = tpu.matmul %313, %0, %cst_122 {dimension_numbers = #tpu.dot_dimension_numbers<[1], [0], [0], [1], [0, 0, 1, 1], [], []>} : vector<2x40xf32>, vector<40x144xf32>, vector<2x144xf32> -> vector<2x144xf32>
    %315 = arith.addf %314, %3 : vector<2x144xf32>
    %316 = vector.extract_strided_slice %315 {offsets = [0, 128], sizes = [2, 16], strides = [1, 1]} : vector<2x144xf32> to vector<2x16xf32>
    %317 = arith.negf %316 : vector<2x16xf32>
    %318 = math.exp %317 : vector<2x16xf32>
    %cst_123 = arith.constant 1.000000e+00 : f32
    %319 = vector.broadcast %cst_123 : f32 to vector<2x16xf32>
    %320 = arith.addf %319, %318 : vector<2x16xf32>
    %321 = arith.divf %319, %320 : vector<2x16xf32>
    %322 = math.tanh %316 : vector<2x16xf32>
    %323 = vector.extract_strided_slice %321 {offsets = [0, 0], sizes = [2, 4], strides = [1, 1]} : vector<2x16xf32> to vector<2x4xf32>
    %324 = vector.extract_strided_slice %321 {offsets = [0, 4], sizes = [2, 4], strides = [1, 1]} : vector<2x16xf32> to vector<2x4xf32>
    %325 = vector.extract_strided_slice %322 {offsets = [0, 8], sizes = [2, 4], strides = [1, 1]} : vector<2x16xf32> to vector<2x4xf32>
    %326 = vector.extract_strided_slice %321 {offsets = [0, 12], sizes = [2, 4], strides = [1, 1]} : vector<2x16xf32> to vector<2x4xf32>
    %327 = arith.mulf %324, %290 : vector<2x4xf32>
    %328 = arith.mulf %323, %325 : vector<2x4xf32>
    %329 = arith.addf %327, %328 : vector<2x4xf32>
    %330 = math.tanh %329 : vector<2x4xf32>
    %331 = arith.mulf %326, %330 : vector<2x4xf32>
    %c14_124 = arith.constant 14 : index
    %c0_125 = arith.constant 0 : index
    %332 = vector.load %arg3[%c14_124, %c0_125] : memref<16x4xf32, #tpu.memory_space<vmem>>, vector<2x4xf32>
    tpu.vector_store %arg3[%c14_124, %c0_125], %331 {strides = array<i32>} : memref<16x4xf32, #tpu.memory_space<vmem>>, vector<2x4xf32>,
    return
  }
}

</mosaic_0001>

<llo_original>
// kernel: lstm_autoencoder_forward.1
$region0: #{lstm_autoencoder_forward.1}
  #allocation0 [shape = 'u32[]', space=smem, size = 0x4, offset = 0x4, fixed_abs, tag = 'smem constant byte address 0x4 - core index']
  #allocation1 [shape = 'u32[72,128]{1,0:T(1,128)}', space=vmem, size = 0x9000, scoped, tag = 'internal scratch']
  #allocation2 [shape = 'f32[2,40]{1,0:T(2,128)}', space=vmem, size = 0x400, scoped, tag = 'scratch operand']
  %s0 = inlined_call_operand.vmem [shape: f32[16,4], index: 0, kind: input, shape index: {}]
  %s1 = inlined_call_operand.hbm [shape: f32[40,144], index: 1, kind: input, shape index: {}]
  %s2 = inlined_call_operand.vmem [shape: f32[1,144], index: 2, kind: input, shape index: {}]
  %s3 = inlined_call_operand.vmem [shape: f32[16,4], index: 3, kind: output, shape index: {}]
  %s4 = sld [smem:[#allocation0]]
  $region26: #{lstm_autoencoder_forward.1} parent=0
    _
  %s6 = ssub.s32 1, %s4
  %s7 = scalar_select 0, %s6, %s4
  $region1: #{lstm_autoencoder_forward.1} parent=0
    #allocation3 [shape = 'u8[40960]{0}', space=vmem, size = 0xa000, scoped, tag = 'input window, operand 1, single buffered']
    #allocation4 [shape = 's32[1]{0}', space=sflag, size = 0x4, scoped, tag = 'scoped memory for lstm_autoencoder_forward.1']
    %8 = vsyncpa [#allocation4], 0
    // Predicated region
    $region2: #{lstm_autoencoder_forward.1} parent=1 // pred_check
      _
    $region3: #{lstm_autoencoder_forward.1} parent=1 // pred_check_branch
      %10 = sbr.rel (0) target = $region5
    $region4: #{lstm_autoencoder_forward.1} parent=1 // pred_region
      _
    $region5: #{lstm_autoencoder_forward.1} parent=1 // pred_fallthru
      _
    // Predicated region
    $region6: #{lstm_autoencoder_forward.1} parent=1 // pred_check
      _
    $region7: #{lstm_autoencoder_forward.1} parent=1 // pred_check_branch
      %12 = sbr.rel (0) target = $region9
    $region8: #{lstm_autoencoder_forward.1} parent=1 // pred_region
      %14 = vsyncadd [#allocation4], 0
      %s15 = sshll.u32 %s1, 4
      %s16 = int_to_ptr.hbm [resolvable:$true] %s15
      %s17 = sshll.u32 [#allocation3], 4
      %s18 = int_to_ptr.vmem [resolvable:$true] %s17
      %23 = dma.hbm_to_vmem [thread:$0]  %s16, 1280, %s18, [#allocation4], 256, 256, 16
    $region9: #{lstm_autoencoder_forward.1} parent=1 // pred_fallthru
      _
    // Predicated region
    $region10: #{lstm_autoencoder_forward.1} parent=1 // pred_check
      _
    $region11: #{lstm_autoencoder_forward.1} parent=1 // pred_check_branch
      %25 = sbr.rel (0) target = $region13
    $region12: #{lstm_autoencoder_forward.1} parent=1 // pred_region
      _
    $region13: #{lstm_autoencoder_forward.1} parent=1 // pred_fallthru
      _
    // Predicated region
    $region14: #{lstm_autoencoder_forward.1} parent=1 // pred_check
      _
    $region15: #{lstm_autoencoder_forward.1} parent=1 // pred_check_branch
      %27 = sbr.rel (0) target = $region17
    $region16: #{lstm_autoencoder_forward.1} parent=1 // pred_region
      %29 = dma.done [#allocation4], 1280
    $region17: #{lstm_autoencoder_forward.1} parent=1 // pred_fallthru
      _
    %v30 = vld [vmem:[#allocation3] sm:$0xff]
    %v31 = vld [vmem:[#allocation3 + $0x8] sm:$0xff]
    %v32 = vld [vmem:[#allocation3 + $0x10] sm:$0xff]
    %v33 = vld [vmem:[#allocation3 + $0x18] sm:$0xff]
    %v34 = vld [vmem:[#allocation3 + $0x20] sm:$0xff]
    %v35 = vld [vmem:[#allocation3 + $0x28] sm:$0xff]
    %v36 = vld [vmem:[#allocation3 + $0x30] sm:$0xff]
    %v37 = vld [vmem:[#allocation3 + $0x38] sm:$0xff]
    %v38 = vld [vmem:[#allocation3 + $0x40] sm:$0xff]
    %v39 = vld [vmem:[#allocation3 + $0x48] sm:$0xff]
    %v40 = vld [vmem:[%s2] sm:$0x3]
    %v42 = vperm.slane %v40, 0
    %v43 = vperm.slane %v40, 1
    %v46 = vld [vmem:[%s0] sm:$0x3]
    %vm47 = vcmask 254976
    %48 = vst.msk [vmem:[#allocation2] sm:$0x3] %vm47, 0.0
    %vm49 = vcmask 288000
    %50 = vst.msk [vmem:[#allocation2] sm:$0x3] %vm49, 0.0
    %52 = vrot.lane.b32.xlu0 %v46, 36
    %v53 = vpop.permute.xlu0 %52
    %vm55 = vcmask 320800
    %56 = vst.msk [vmem:[#allocation2] sm:$0x3] %vm55, %v53
    %v57 = vld [vmem:[#allocation2] sm:$0x3]
    %vm58 = vcmask 326656
    %v60 = vsel %vm58, %v57, 0
    %62 = vmatpush.msra.mxu0 0.0
    %63 = vmatpush.msra.mxu0 0.0
    %64 = vmatpush.msra.mxu0 0.0
    %65 = vmatpush.msra.mxu0 0.0
    %66 = vmatpush.msra.mxu0 0.0
    %67 = vmatpush.msra.mxu0 0.0
    %68 = vmatpush.msra.mxu0 0.0
    %69 = vmatpush.msra.mxu0 0.0
    %70 = vmatpush.msra.mxu0 0.0
    %71 = vmatpush.msra.mxu0 0.0
    %72 = vmatpush.msra.mxu0 0.0
    %73 = vmatpush.msra.mxu0 %v38
    %74 = vmatpush.msra.mxu0 %v36
    %75 = vmatpush.msra.mxu0 %v34
    %76 = vmatpush.msra.mxu0 %v32
    %77 = vmatpush.msra.mxu0 %v30
    %78 = vmatmul.f32.gmra.mxu0 %v60
    %v79 = vpop.f32.mrf.mxu0
    %v80 = vadd.f32 %v42, %v79
    %81 = vdwg.mxu0
    %v82 = vxor.u32 %v80, 2147483648
    %v83 = vmul.f32 %v82, 1.442695
    %v84 = vpow.pop %v83
    %v85 = vadd.f32 %v84, 1.0
    %v86 = vrcp.pop %v85
    %v87 = vmul.f32 %v85, %v86
    %v88 = vsub.f32 1.0, %v87
    %v89 = vmul.f32 %v86, %v88
    %v90 = vadd.f32 %v86, %v89
    %vm91 = vweird.f32 %v85
    %vm92 = vweird.f32 %v86
    %vm93 = vmor %vm91, %vm92
    %v94 = vsel %vm93, %v86, %v90
    %v95 = vand.u32 2147483647, %v85
    %vm96 = vcmp.eq.f32.partialorder %v95, 8.507059e+37
    %v97 = vand.u32 %v85, 2147483648
    %v98 = vor.u32 1.1754944e-38, %v97
    %v99 = vsel %vm96, %v98, %v94
    %v100 = vmul.f32 1.0, %v99
    %v101 = vtanh.pop %v80
    %v102 = vmul.f32 %v100, 0.0
    %104 = vrot.lane.b32.xlu0 %v101, 64
    %v105 = vpop.permute.xlu0 %104
    %v107 = vmul.f32 %v100, %v105
    %109 = vrot.lane.b32.xlu0 %v107, 32
    %v110 = vpop.permute.xlu0 %109
    %v112 = vadd.f32 %v102, %v110
    %v113 = vtanh.pop %v112
    %115 = vrot.lane.b32.xlu0 %v113, 64
    %v116 = vpop.permute.xlu0 %115
    %v118 = vmul.f32 %v100, %v116
    %v119 = vld [vmem:[%s0 + $0x2] sm:$0x3]
    %121 = vrot.lane.b32.xlu0 %v118, 32
    %v122 = vpop.permute.xlu0 %121
    %124 = vst.msk [vmem:[#allocation2] sm:$0x3] %vm47, %v122
    %125 = vst.msk [vmem:[#allocation2] sm:$0x3] %vm49, 0.0
    %127 = vrot.lane.b32.xlu0 %v119, 36
    %v128 = vpop.permute.xlu0 %127
    %130 = vst.msk [vmem:[#allocation2] sm:$0x3] %vm55, %v128
    %v131 = vld [vmem:[#allocation2] sm:$0x3]
    %v133 = vsel %vm58, %v131, 0
    %135 = vmatpush.msra.mxu0 0.0
    %136 = vmatpush.msra.mxu0 0.0
    %137 = vmatpush.msra.mxu0 0.0
    %138 = vmatpush.msra.mxu0 0.0
    %139 = vmatpush.msra.mxu0 0.0
    %140 = vmatpush.msra.mxu0 0.0
    %141 = vmatpush.msra.mxu0 0.0
    %142 = vmatpush.msra.mxu0 0.0
    %143 = vmatpush.msra.mxu0 0.0
    %144 = vmatpush.msra.mxu0 0.0
    %145 = vmatpush.msra.mxu0 0.0
    %146 = vmatpush.msra.mxu0 %v38
    %147 = vmatpush.msra.mxu0 %v36
    %148 = vmatpush.msra.mxu0 %v34
    %149 = vmatpush.msra.mxu0 %v32
    %150 = vmatpush.msra.mxu0 %v30
    %151 = vmatmul.f32.gmra.mxu0 %v133
    %v152 = vpop.f32.mrf.mxu0
    %v153 = vadd.f32 %v42, %v152
    %154 = vdwg.mxu0
    %155 = vmatpush.msra.mxu0 0.0
    %156 = vmatpush.msra.mxu0 0.0
    %157 = vmatpush.msra.mxu0 0.0
    %158 = vmatpush.msra.mxu0 0.0
    %159 = vmatpush.msra.mxu0 0.0
    %160 = vmatpush.msra.mxu0 0.0
    %161 = vmatpush.msra.mxu0 0.0
    %162 = vmatpush.msra.mxu0 0.0
    %163 = vmatpush.msra.mxu0 0.0
    %164 = vmatpush.msra.mxu0 0.0
    %165 = vmatpush.msra.mxu0 0.0
    %166 = vmatpush.msra.mxu0 %v39
    %167 = vmatpush.msra.mxu0 %v37
    %168 = vmatpush.msra.mxu0 %v35
    %169 = vmatpush.msra.mxu0 %v33
    %170 = vmatpush.msra.mxu0 %v31
    %171 = vmatmul.f32.gmra.mxu0 %v133
    %v172 = vpop.f32.mrf.mxu0
    %v173 = vadd.f32 %v43, %v172
    %174 = vdwg.mxu0
    %v175 = vxor.u32 %v173, 2147483648
    %v176 = vmul.f32 %v175, 1.442695
    %v177 = vpow.pop %v176
    %v178 = vadd.f32 %v177, 1.0
    %v179 = vrcp.pop %v178
    %v180 = vmul.f32 %v178, %v179
    %v181 = vsub.f32 1.0, %v180
    %v182 = vmul.f32 %v179, %v181
    %v183 = vadd.f32 %v179, %v182
    %vm184 = vweird.f32 %v178
    %vm185 = vweird.f32 %v179
    %vm186 = vmor %vm184, %vm185
    %v187 = vsel %vm186, %v179, %v183
    %v188 = vand.u32 2147483647, %v178
    %vm189 = vcmp.eq.f32.partialorder %v188, 8.507059e+37
    %v190 = vand.u32 %v178, 2147483648
    %v191 = vor.u32 1.1754944e-38, %v190
    %v192 = vsel %vm189, %v191, %v187
    %v193 = vmul.f32 1.0, %v192
    %v194 = vtanh.pop %v173
    %v195 = vmul.f32 %v193, 0.0
    %197 = vrot.lane.b32.xlu0 %v194, 120
    %v198 = vpop.permute.xlu0 %197
    %v200 = vmul.f32 %v193, %v198
    %202 = vrot.lane.b32.xlu0 %v200, 4
    %v203 = vpop.permute.xlu0 %202
    %v205 = vadd.f32 %v195, %v203
    %v206 = vtanh.pop %v205
    %208 = vrot.lane.b32.xlu0 %v206, 8
    %v209 = vpop.permute.xlu0 %208
    %v211 = vmul.f32 %v193, %v209
    %213 = vrot.lane.b32.xlu0 %v211, 116
    %v214 = vpop.permute.xlu0 %213
    %vm216 = vcmask 25600
    %217 = vst.msk [vmem:[%s3] sm:$0x3] %vm216, %v214
    %v218 = vxor.u32 %v153, 2147483648
    %v219 = vmul.f32 %v218, 1.442695
    %v220 = vpow.pop %v219
    %v221 = vadd.f32 %v220, 1.0
    %v222 = vrcp.pop %v221
    %v223 = vmul.f32 %v221, %v222
    %v224 = vsub.f32 1.0, %v223
    %v225 = vmul.f32 %v222, %v224
    %v226 = vadd.f32 %v222, %v225
    %vm227 = vweird.f32 %v221
    %vm228 = vweird.f32 %v222
    %vm229 = vmor %vm227, %vm228
    %v230 = vsel %vm229, %v222, %v226
    %v231 = vand.u32 2147483647, %v221
    %vm232 = vcmp.eq.f32.partialorder %v231, 8.507059e+37
    %v233 = vand.u32 %v221, 2147483648
    %v234 = vor.u32 1.1754944e-38, %v233
    %v235 = vsel %vm232, %v234, %v230
    %v236 = vmul.f32 1.0, %v235
    %v237 = vtanh.pop %v153
    %v238 = vmul.f32 %v236, %v112
    %240 = vrot.lane.b32.xlu0 %v237, 64
    %v241 = vpop.permute.xlu0 %240
    %v243 = vmul.f32 %v236, %v241
    %245 = vrot.lane.b32.xlu0 %v243, 32
    %v246 = vpop.permute.xlu0 %245
    %v248 = vadd.f32 %v238, %v246
    %v249 = vtanh.pop %v248
    %251 = vrot.lane.b32.xlu0 %v249, 64
    %v252 = vpop.permute.xlu0 %251
    %v254 = vmul.f32 %v236, %v252
    %v255 = vld [vmem:[%s0 + $0x4] sm:$0x3]
    %257 = vrot.lane.b32.xlu0 %v254, 32
    %v258 = vpop.permute.xlu0 %257
    %260 = vst.msk [vmem:[#allocation2] sm:$0x3] %vm47, %v258
    %261 = vrot.lane.b32.xlu0 %v211, 20
    %v262 = vpop.permute.xlu0 %261
    %264 = vst.msk [vmem:[#allocation2] sm:$0x3] %vm49, %v262
    %266 = vrot.lane.b32.xlu0 %v255, 36
    %v267 = vpop.permute.xlu0 %266
    %269 = vst.msk [vmem:[#allocation2] sm:$0x3] %vm55, %v267
    %v270 = vld [vmem:[#allocation2] sm:$0x3]
    %v272 = vsel %vm58, %v270, 0
    %274 = vmatpush.msra.mxu0 0.0
    %275 = vmatpush.msra.mxu0 0.0
    %276 = vmatpush.msra.mxu0 0.0
    %277 = vmatpush.msra.mxu0 0.0
    %278 = vmatpush.msra.mxu0 0.0
    %279 = vmatpush.msra.mxu0 0.0
    %280 = vmatpush.msra.mxu0 0.0
    %281 = vmatpush.msra.mxu0 0.0
    %282 = vmatpush.msra.mxu0 0.0
    %283 = vmatpush.msra.mxu0 0.0
    %284 = vmatpush.msra.mxu0 0.0
    %285 = vmatpush.msra.mxu0 %v38
    %286 = vmatpush.msra.mxu0 %v36
    %287 = vmatpush.msra.mxu0 %v34
    %288 = vmatpush.msra.mxu0 %v32
    %289 = vmatpush.msra.mxu0 %v30
    %290 = vmatmul.f32.gmra.mxu0 %v272
    %v291 = vpop.f32.mrf.mxu0
    %v292 = vadd.f32 %v42, %v291
    %293 = vdwg.mxu0
    %294 = vmatpush.msra.mxu0 0.0
    %295 = vmatpush.msra.mxu0 0.0
    %296 = vmatpush.msra.mxu0 0.0
    %297 = vmatpush.msra.mxu0 0.0
    %298 = vmatpush.msra.mxu0 0.0
    %299 = vmatpush.msra.mxu0 0.0
    %300 = vmatpush.msra.mxu0 0.0
    %301 = vmatpush.msra.mxu0 0.0
    %302 = vmatpush.msra.mxu0 0.0
    %303 = vmatpush.msra.mxu0 0.0
    %304 = vmatpush.msra.mxu0 0.0
    %305 = vmatpush.msra.mxu0 %v39
    %306 = vmatpush.msra.mxu0 %v37
    %307 = vmatpush.msra.mxu0 %v35
    %308 = vmatpush.msra.mxu0 %v33
    %309 = vmatpush.msra.mxu0 %v31
    %310 = vmatmul.f32.gmra.mxu0 %v272
    %v311 = vpop.f32.mrf.mxu0
    %v312 = vadd.f32 %v43, %v311
    %313 = vdwg.mxu0
    %v314 = vxor.u32 %v312, 2147483648
    %v315 = vmul.f32 %v314, 1.442695
    %v316 = vpow.pop %v315
    %v317 = vadd.f32 %v316, 1.0
    %v318 = vrcp.pop %v317
    %v319 = vmul.f32 %v317, %v318
    %v320 = vsub.f32 1.0, %v319
    %v321 = vmul.f32 %v318, %v320
    %v322 = vadd.f32 %v318, %v321
    %vm323 = vweird.f32 %v317
    %vm324 = vweird.f32 %v318
    %vm325 = vmor %vm323, %vm324
    %v326 = vsel %vm325, %v318, %v322
    %v327 = vand.u32 2147483647, %v317
    %vm328 = vcmp.eq.f32.partialorder %v327, 8.507059e+37
    %v329 = vand.u32 %v317, 2147483648
    %v330 = vor.u32 1.1754944e-38, %v329
    %v331 = vsel %vm328, %v330, %v326
    %v332 = vmul.f32 1.0, %v331
    %v333 = vtanh.pop %v312
    %v334 = vmul.f32 %v332, %v205
    %336 = vrot.lane.b32.xlu0 %v333, 120
    %v337 = vpop.permute.xlu0 %336
    %v339 = vmul.f32 %v332, %v337
    %341 = vrot.lane.b32.xlu0 %v339, 4
    %v342 = vpop.permute.xlu0 %341
    %v344 = vadd.f32 %v334, %v342
    %v345 = vtanh.pop %v344
    %347 = vrot.lane.b32.xlu0 %v345, 8
    %v348 = vpop.permute.xlu0 %347
    %v350 = vmul.f32 %v332, %v348
    %352 = vrot.lane.b32.xlu0 %v350, 116
    %v353 = vpop.permute.xlu0 %352
    %355 = vst.msk [vmem:[%s3 + $0x2] sm:$0x3] %vm216, %v353
    %v356 = vxor.u32 %v292, 2147483648
    %v357 = vmul.f32 %v356, 1.442695
    %v358 = vpow.pop %v357
    %v359 = vadd.f32 %v358, 1.0
    %v360 = vrcp.pop %v359
    %v361 = vmul.f32 %v359, %v360
    %v362 = vsub.f32 1.0, %v361
    %v363 = vmul.f32 %v360, %v362
    %v364 = vadd.f32 %v360, %v363
    %vm365 = vweird.f32 %v359
    %vm366 = vweird.f32 %v360
    %vm367 = vmor %vm365, %vm366
    %v368 = vsel %vm367, %v360, %v364
    %v369 = vand.u32 2147483647, %v359
    %vm370 = vcmp.eq.f32.partialorder %v369, 8.507059e+37
    %v371 = vand.u32 %v359, 2147483648
    %v372 = vor.u32 1.1754944e-38, %v371
    %v373 = vsel %vm370, %v372, %v368
    %v374 = vmul.f32 1.0, %v373
    %v375 = vtanh.pop %v292
    %v376 = vmul.f32 %v374, %v248
    %378 = vrot.lane.b32.xlu0 %v375, 64
    %v379 = vpop.permute.xlu0 %378
    %v381 = vmul.f32 %v374, %v379
    %383 = vrot.lane.b32.xlu0 %v381, 32
    %v384 = vpop.permute.xlu0 %383
    %v386 = vadd.f32 %v376, %v384
    %v387 = vtanh.pop %v386
    %389 = vrot.lane.b32.xlu0 %v387, 64
    %v390 = vpop.permute.xlu0 %389
    %v392 = vmul.f32 %v374, %v390
    %v393 = vld [vmem:[%s0 + $0x6] sm:$0x3]
    %395 = vrot.lane.b32.xlu0 %v392, 32
    %v396 = vpop.permute.xlu0 %395
    %398 = vst.msk [vmem:[#allocation2] sm:$0x3] %vm47, %v396
    %399 = vrot.lane.b32.xlu0 %v350, 20
    %v400 = vpop.permute.xlu0 %399
    %402 = vst.msk [vmem:[#allocation2] sm:$0x3] %vm49, %v400
    %404 = vrot.lane.b32.xlu0 %v393, 36
    %v405 = vpop.permute.xlu0 %404
    %407 = vst.msk [vmem:[#allocation2] sm:$0x3] %vm55, %v405
    %v408 = vld [vmem:[#allocation2] sm:$0x3]
    %v410 = vsel %vm58, %v408, 0
    %412 = vmatpush.msra.mxu0 0.0
    %413 = vmatpush.msra.mxu0 0.0
    %414 = vmatpush.msra.mxu0 0.0
    %415 = vmatpush.msra.mxu0 0.0
    %416 = vmatpush.msra.mxu0 0.0
    %417 = vmatpush.msra.mxu0 0.0
    %418 = vmatpush.msra.mxu0 0.0
    %419 = vmatpush.msra.mxu0 0.0
    %420 = vmatpush.msra.mxu0 0.0
    %421 = vmatpush.msra.mxu0 0.0
    %422 = vmatpush.msra.mxu0 0.0
    %423 = vmatpush.msra.mxu0 %v38
    %424 = vmatpush.msra.mxu0 %v36
    %425 = vmatpush.msra.mxu0 %v34
    %426 = vmatpush.msra.mxu0 %v32
    %427 = vmatpush.msra.mxu0 %v30
    %428 = vmatmul.f32.gmra.mxu0 %v410
    %v429 = vpop.f32.mrf.mxu0
    %v430 = vadd.f32 %v42, %v429
    %431 = vdwg.mxu0
    %432 = vmatpush.msra.mxu0 0.0
    %433 = vmatpush.msra.mxu0 0.0
    %434 = vmatpush.msra.mxu0 0.0
    %435 = vmatpush.msra.mxu0 0.0
    %436 = vmatpush.msra.mxu0 0.0
    %437 = vmatpush.msra.mxu0 0.0
    %438 = vmatpush.msra.mxu0 0.0
    %439 = vmatpush.msra.mxu0 0.0
    %440 = vmatpush.msra.mxu0 0.0
    %441 = vmatpush.msra.mxu0 0.0
    %442 = vmatpush.msra.mxu0 0.0
    %443 = vmatpush.msra.mxu0 %v39
    %444 = vmatpush.msra.mxu0 %v37
    %445 = vmatpush.msra.mxu0 %v35
    %446 = vmatpush.msra.mxu0 %v33
    %447 = vmatpush.msra.mxu0 %v31
    %448 = vmatmul.f32.gmra.mxu0 %v410
    %v449 = vpop.f32.mrf.mxu0
    %v450 = vadd.f32 %v43, %v449
    %451 = vdwg.mxu0
    %v452 = vxor.u32 %v450, 2147483648
    %v453 = vmul.f32 %v452, 1.442695
    %v454 = vpow.pop %v453
    %v455 = vadd.f32 %v454, 1.0
    %v456 = vrcp.pop %v455
    %v457 = vmul.f32 %v455, %v456
    %v458 = vsub.f32 1.0, %v457
    %v459 = vmul.f32 %v456, %v458
    %v460 = vadd.f32 %v456, %v459
    %vm461 = vweird.f32 %v455
    %vm462 = vweird.f32 %v456
    %vm463 = vmor %vm461, %vm462
    %v464 = vsel %vm463, %v456, %v460
    %v465 = vand.u32 2147483647, %v455
    %vm466 = vcmp.eq.f32.partialorder %v465, 8.507059e+37
    %v467 = vand.u32 %v455, 2147483648
    %v468 = vor.u32 1.1754944e-38, %v467
    %v469 = vsel %vm466, %v468, %v464
    %v470 = vmul.f32 1.0, %v469
    %v471 = vtanh.pop %v450
    %v472 = vmul.f32 %v470, %v344
    %474 = vrot.lane.b32.xlu0 %v471, 120
    %v475 = vpop.permute.xlu0 %474
    %v477 = vmul.f32 %v470, %v475
    %479 = vrot.lane.b32.xlu0 %v477, 4
    %v480 = vpop.permute.xlu0 %479
    %v482 = vadd.f32 %v472, %v480
    %v483 = vtanh.pop %v482
    %485 = vrot.lane.b32.xlu0 %v483, 8
    %v486 = vpop.permute.xlu0 %485
    %v488 = vmul.f32 %v470, %v486
    %490 = vrot.lane.b32.xlu0 %v488, 116
    %v491 = vpop.permute.xlu0 %490
    %493 = vst.msk [vmem:[%s3 + $0x4] sm:$0x3] %vm216, %v491
    %v494 = vxor.u32 %v430, 2147483648
    %v495 = vmul.f32 %v494, 1.442695
    %v496 = vpow.pop %v495
    %v497 = vadd.f32 %v496, 1.0
    %v498 = vrcp.pop %v497
    %v499 = vmul.f32 %v497, %v498
    %v500 = vsub.f32 1.0, %v499
    %v501 = vmul.f32 %v498, %v500
    %v502 = vadd.f32 %v498, %v501
    %vm503 = vweird.f32 %v497
    %vm504 = vweird.f32 %v498
    %vm505 = vmor %vm503, %vm504
    %v506 = vsel %vm505, %v498, %v502
    %v507 = vand.u32 2147483647, %v497
    %vm508 = vcmp.eq.f32.partialorder %v507, 8.507059e+37
    %v509 = vand.u32 %v497, 2147483648
    %v510 = vor.u32 1.1754944e-38, %v509
    %v511 = vsel %vm508, %v510, %v506
    %v512 = vmul.f32 1.0, %v511
    %v513 = vtanh.pop %v430
    %v514 = vmul.f32 %v512, %v386
    %516 = vrot.lane.b32.xlu0 %v513, 64
    %v517 = vpop.permute.xlu0 %516
    %v519 = vmul.f32 %v512, %v517
    %521 = vrot.lane.b32.xlu0 %v519, 32
    %v522 = vpop.permute.xlu0 %521
    %v524 = vadd.f32 %v514, %v522
    %v525 = vtanh.pop %v524
    %527 = vrot.lane.b32.xlu0 %v525, 64
    %v528 = vpop.permute.xlu0 %527
    %v530 = vmul.f32 %v512, %v528
    %v531 = vld [vmem:[%s0 + $0x8] sm:$0x3]
    %533 = vrot.lane.b32.xlu0 %v530, 32
    %v534 = vpop.permute.xlu0 %533
    %536 = vst.msk [vmem:[#allocation2] sm:$0x3] %vm47, %v534
    %537 = vrot.lane.b32.xlu0 %v488, 20
    %v538 = vpop.permute.xlu0 %537
    %540 = vst.msk [vmem:[#allocation2] sm:$0x3] %vm49, %v538
    %542 = vrot.lane.b32.xlu0 %v531, 36
    %v543 = vpop.permute.xlu0 %542
    %545 = vst.msk [vmem:[#allocation2] sm:$0x3] %vm55, %v543
    %v546 = vld [vmem:[#allocation2] sm:$0x3]
    %v548 = vsel %vm58, %v546, 0
    %550 = vmatpush.msra.mxu0 0.0
    %551 = vmatpush.msra.mxu0 0.0
    %552 = vmatpush.msra.mxu0 0.0
    %553 = vmatpush.msra.mxu0 0.0
    %554 = vmatpush.msra.mxu0 0.0
    %555 = vmatpush.msra.mxu0 0.0
    %556 = vmatpush.msra.mxu0 0.0
    %557 = vmatpush.msra.mxu0 0.0
    %558 = vmatpush.msra.mxu0 0.0
    %559 = vmatpush.msra.mxu0 0.0
    %560 = vmatpush.msra.mxu0 0.0
    %561 = vmatpush.msra.mxu0 %v38
    %562 = vmatpush.msra.mxu0 %v36
    %563 = vmatpush.msra.mxu0 %v34
    %564 = vmatpush.msra.mxu0 %v32
    %565 = vmatpush.msra.mxu0 %v30
    %566 = vmatmul.f32.gmra.mxu0 %v548
    %v567 = vpop.f32.mrf.mxu0
    %v568 = vadd.f32 %v42, %v567
    %569 = vdwg.mxu0
    %570 = vmatpush.msra.mxu0 0.0
    %571 = vmatpush.msra.mxu0 0.0
    %572 = vmatpush.msra.mxu0 0.0
    %573 = vmatpush.msra.mxu0 0.0
    %574 = vmatpush.msra.mxu0 0.0
    %575 = vmatpush.msra.mxu0 0.0
    %576 = vmatpush.msra.mxu0 0.0
    %577 = vmatpush.msra.mxu0 0.0
    %578 = vmatpush.msra.mxu0 0.0
    %579 = vmatpush.msra.mxu0 0.0
    %580 = vmatpush.msra.mxu0 0.0
    %581 = vmatpush.msra.mxu0 %v39
    %582 = vmatpush.msra.mxu0 %v37
    %583 = vmatpush.msra.mxu0 %v35
    %584 = vmatpush.msra.mxu0 %v33
    %585 = vmatpush.msra.mxu0 %v31
    %586 = vmatmul.f32.gmra.mxu0 %v548
    %v587 = vpop.f32.mrf.mxu0
    %v588 = vadd.f32 %v43, %v587
    %589 = vdwg.mxu0
    %v590 = vxor.u32 %v588, 2147483648
    %v591 = vmul.f32 %v590, 1.442695
    %v592 = vpow.pop %v591
    %v593 = vadd.f32 %v592, 1.0
    %v594 = vrcp.pop %v593
    %v595 = vmul.f32 %v593, %v594
    %v596 = vsub.f32 1.0, %v595
    %v597 = vmul.f32 %v594, %v596
    %v598 = vadd.f32 %v594, %v597
    %vm599 = vweird.f32 %v593
    %vm600 = vweird.f32 %v594
    %vm601 = vmor %vm599, %vm600
    %v602 = vsel %vm601, %v594, %v598
    %v603 = vand.u32 2147483647, %v593
    %vm604 = vcmp.eq.f32.partialorder %v603, 8.507059e+37
    %v605 = vand.u32 %v593, 2147483648
    %v606 = vor.u32 1.1754944e-38, %v605
    %v607 = vsel %vm604, %v606, %v602
    %v608 = vmul.f32 1.0, %v607
    %v609 = vtanh.pop %v588
    %v610 = vmul.f32 %v608, %v482
    %612 = vrot.lane.b32.xlu0 %v609, 120
    %v613 = vpop.permute.xlu0 %612
    %v615 = vmul.f32 %v608, %v613
    %617 = vrot.lane.b32.xlu0 %v615, 4
    %v618 = vpop.permute.xlu0 %617
    %v620 = vadd.f32 %v610, %v618
    %v621 = vtanh.pop %v620
    %623 = vrot.lane.b32.xlu0 %v621, 8
    %v624 = vpop.permute.xlu0 %623
    %v626 = vmul.f32 %v608, %v624
    %628 = vrot.lane.b32.xlu0 %v626, 116
    %v629 = vpop.permute.xlu0 %628
    %631 = vst.msk [vmem:[%s3 + $0x6] sm:$0x3] %vm216, %v629
    %v632 = vxor.u32 %v568, 2147483648
    %v633 = vmul.f32 %v632, 1.442695
    %v634 = vpow.pop %v633
    %v635 = vadd.f32 %v634, 1.0
    %v636 = vrcp.pop %v635
    %v637 = vmul.f32 %v635, %v636
    %v638 = vsub.f32 1.0, %v637
    %v639 = vmul.f32 %v636, %v638
    %v640 = vadd.f32 %v636, %v639
    %vm641 = vweird.f32 %v635
    %vm642 = vweird.f32 %v636
    %vm643 = vmor %vm641, %vm642
    %v644 = vsel %vm643, %v636, %v640
    %v645 = vand.u32 2147483647, %v635
    %vm646 = vcmp.eq.f32.partialorder %v645, 8.507059e+37
    %v647 = vand.u32 %v635, 2147483648
    %v648 = vor.u32 1.1754944e-38, %v647
    %v649 = vsel %vm646, %v648, %v644
    %v650 = vmul.f32 1.0, %v649
    %v651 = vtanh.pop %v568
    %v652 = vmul.f32 %v650, %v524
    %654 = vrot.lane.b32.xlu0 %v651, 64
    %v655 = vpop.permute.xlu0 %654
    %v657 = vmul.f32 %v650, %v655
    %659 = vrot.lane.b32.xlu0 %v657, 32
    %v660 = vpop.permute.xlu0 %659
    %v662 = vadd.f32 %v652, %v660
    %v663 = vtanh.pop %v662
    %665 = vrot.lane.b32.xlu0 %v663, 64
    %v666 = vpop.permute.xlu0 %665
    %v668 = vmul.f32 %v650, %v666
    %v669 = vld [vmem:[%s0 + $0xa] sm:$0x3]
    %671 = vrot.lane.b32.xlu0 %v668, 32
    %v672 = vpop.permute.xlu0 %671
    %674 = vst.msk [vmem:[#allocation2] sm:$0x3] %vm47, %v672
    %675 = vrot.lane.b32.xlu0 %v626, 20
    %v676 = vpop.permute.xlu0 %675
    %678 = vst.msk [vmem:[#allocation2] sm:$0x3] %vm49, %v676
    %680 = vrot.lane.b32.xlu0 %v669, 36
    %v681 = vpop.permute.xlu0 %680
    %683 = vst.msk [vmem:[#allocation2] sm:$0x3] %vm55, %v681
    %v684 = vld [vmem:[#allocation2] sm:$0x3]
    %v686 = vsel %vm58, %v684, 0
    %688 = vmatpush.msra.mxu0 0.0
    %689 = vmatpush.msra.mxu0 0.0
    %690 = vmatpush.msra.mxu0 0.0
    %691 = vmatpush.msra.mxu0 0.0
    %692 = vmatpush.msra.mxu0 0.0
    %693 = vmatpush.msra.mxu0 0.0
    %694 = vmatpush.msra.mxu0 0.0
    %695 = vmatpush.msra.mxu0 0.0
    %696 = vmatpush.msra.mxu0 0.0
    %697 = vmatpush.msra.mxu0 0.0
    %698 = vmatpush.msra.mxu0 0.0
    %699 = vmatpush.msra.mxu0 %v38
    %700 = vmatpush.msra.mxu0 %v36
    %701 = vmatpush.msra.mxu0 %v34
    %702 = vmatpush.msra.mxu0 %v32
    %703 = vmatpush.msra.mxu0 %v30
    %704 = vmatmul.f32.gmra.mxu0 %v686
    %v705 = vpop.f32.mrf.mxu0
    %v706 = vadd.f32 %v42, %v705
    %707 = vdwg.mxu0
    %708 = vmatpush.msra.mxu0 0.0
    %709 = vmatpush.msra.mxu0 0.0
    %710 = vmatpush.msra.mxu0 0.0
    %711 = vmatpush.msra.mxu0 0.0
    %712 = vmatpush.msra.mxu0 0.0
    %713 = vmatpush.msra.mxu0 0.0
    %714 = vmatpush.msra.mxu0 0.0
    %715 = vmatpush.msra.mxu0 0.0
    %716 = vmatpush.msra.mxu0 0.0
    %717 = vmatpush.msra.mxu0 0.0
    %718 = vmatpush.msra.mxu0 0.0
    %719 = vmatpush.msra.mxu0 %v39
    %720 = vmatpush.msra.mxu0 %v37
    %721 = vmatpush.msra.mxu0 %v35
    %722 = vmatpush.msra.mxu0 %v33
    %723 = vmatpush.msra.mxu0 %v31
    %724 = vmatmul.f32.gmra.mxu0 %v686
    %v725 = vpop.f32.mrf.mxu0
    %v726 = vadd.f32 %v43, %v725
    %727 = vdwg.mxu0
    %v728 = vxor.u32 %v726, 2147483648
    %v729 = vmul.f32 %v728, 1.442695
    %v730 = vpow.pop %v729
    %v731 = vadd.f32 %v730, 1.0
    %v732 = vrcp.pop %v731
    %v733 = vmul.f32 %v731, %v732
    %v734 = vsub.f32 1.0, %v733
    %v735 = vmul.f32 %v732, %v734
    %v736 = vadd.f32 %v732, %v735
    %vm737 = vweird.f32 %v731
    %vm738 = vweird.f32 %v732
    %vm739 = vmor %vm737, %vm738
    %v740 = vsel %vm739, %v732, %v736
    %v741 = vand.u32 2147483647, %v731
    %vm742 = vcmp.eq.f32.partialorder %v741, 8.507059e+37
    %v743 = vand.u32 %v731, 2147483648
    %v744 = vor.u32 1.1754944e-38, %v743
    %v745 = vsel %vm742, %v744, %v740
    %v746 = vmul.f32 1.0, %v745
    %v747 = vtanh.pop %v726
    %v748 = vmul.f32 %v746, %v620
    %750 = vrot.lane.b32.xlu0 %v747, 120
    %v751 = vpop.permute.xlu0 %750
    %v753 = vmul.f32 %v746, %v751
    %755 = vrot.lane.b32.xlu0 %v753, 4
    %v756 = vpop.permute.xlu0 %755
    %v758 = vadd.f32 %v748, %v756
    %v759 = vtanh.pop %v758
    %761 = vrot.lane.b32.xlu0 %v759, 8
    %v762 = vpop.permute.xlu0 %761
    %v764 = vmul.f32 %v746, %v762
    %766 = vrot.lane.b32.xlu0 %v764, 116
    %v767 = vpop.permute.xlu0 %766
    %769 = vst.msk [vmem:[%s3 + $0x8] sm:$0x3] %vm216, %v767
    %v770 = vxor.u32 %v706, 2147483648
    %v771 = vmul.f32 %v770, 1.442695
    %v772 = vpow.pop %v771
    %v773 = vadd.f32 %v772, 1.0
    %v774 = vrcp.pop %v773
    %v775 = vmul.f32 %v773, %v774
    %v776 = vsub.f32 1.0, %v775
    %v777 = vmul.f32 %v774, %v776
    %v778 = vadd.f32 %v774, %v777
    %vm779 = vweird.f32 %v773
    %vm780 = vweird.f32 %v774
    %vm781 = vmor %vm779, %vm780
    %v782 = vsel %vm781, %v774, %v778
    %v783 = vand.u32 2147483647, %v773
    %vm784 = vcmp.eq.f32.partialorder %v783, 8.507059e+37
    %v785 = vand.u32 %v773, 2147483648
    %v786 = vor.u32 1.1754944e-38, %v785
    %v787 = vsel %vm784, %v786, %v782
    %v788 = vmul.f32 1.0, %v787
    %v789 = vtanh.pop %v706
    %v790 = vmul.f32 %v788, %v662
    %792 = vrot.lane.b32.xlu0 %v789, 64
    %v793 = vpop.permute.xlu0 %792
    %v795 = vmul.f32 %v788, %v793
    %797 = vrot.lane.b32.xlu0 %v795, 32
    %v798 = vpop.permute.xlu0 %797
    %v800 = vadd.f32 %v790, %v798
    %v801 = vtanh.pop %v800
    %803 = vrot.lane.b32.xlu0 %v801, 64
    %v804 = vpop.permute.xlu0 %803
    %v806 = vmul.f32 %v788, %v804
    %v807 = vld [vmem:[%s0 + $0xc] sm:$0x3]
    %809 = vrot.lane.b32.xlu0 %v806, 32
    %v810 = vpop.permute.xlu0 %809
    %812 = vst.msk [vmem:[#allocation2] sm:$0x3] %vm47, %v810
    %813 = vrot.lane.b32.xlu0 %v764, 20
    %v814 = vpop.permute.xlu0 %813
    %816 = vst.msk [vmem:[#allocation2] sm:$0x3] %vm49, %v814
    %818 = vrot.lane.b32.xlu0 %v807, 36
    %v819 = vpop.permute.xlu0 %818
    %821 = vst.msk [vmem:[#allocation2] sm:$0x3] %vm55, %v819
    %v822 = vld [vmem:[#allocation2] sm:$0x3]
    %v824 = vsel %vm58, %v822, 0
    %826 = vmatpush.msra.mxu0 0.0
    %827 = vmatpush.msra.mxu0 0.0
    %828 = vmatpush.msra.mxu0 0.0
    %829 = vmatpush.msra.mxu0 0.0
    %830 = vmatpush.msra.mxu0 0.0
    %831 = vmatpush.msra.mxu0 0.0
    %832 = vmatpush.msra.mxu0 0.0
    %833 = vmatpush.msra.mxu0 0.0
    %834 = vmatpush.msra.mxu0 0.0
    %835 = vmatpush.msra.mxu0 0.0
    %836 = vmatpush.msra.mxu0 0.0
    %837 = vmatpush.msra.mxu0 %v38
    %838 = vmatpush.msra.mxu0 %v36
    %839 = vmatpush.msra.mxu0 %v34
    %840 = vmatpush.msra.mxu0 %v32
    %841 = vmatpush.msra.mxu0 %v30
    %842 = vmatmul.f32.gmra.mxu0 %v824
    %v843 = vpop.f32.mrf.mxu0
    %v844 = vadd.f32 %v42, %v843
    %845 = vdwg.mxu0
    %846 = vmatpush.msra.mxu0 0.0
    %847 = vmatpush.msra.mxu0 0.0
    %848 = vmatpush.msra.mxu0 0.0
    %849 = vmatpush.msra.mxu0 0.0
    %850 = vmatpush.msra.mxu0 0.0
    %851 = vmatpush.msra.mxu0 0.0
    %852 = vmatpush.msra.mxu0 0.0
    %853 = vmatpush.msra.mxu0 0.0
    %854 = vmatpush.msra.mxu0 0.0
    %855 = vmatpush.msra.mxu0 0.0
    %856 = vmatpush.msra.mxu0 0.0
    %857 = vmatpush.msra.mxu0 %v39
    %858 = vmatpush.msra.mxu0 %v37
    %859 = vmatpush.msra.mxu0 %v35
    %860 = vmatpush.msra.mxu0 %v33
    %861 = vmatpush.msra.mxu0 %v31
    %862 = vmatmul.f32.gmra.mxu0 %v824
    %v863 = vpop.f32.mrf.mxu0
    %v864 = vadd.f32 %v43, %v863
    %865 = vdwg.mxu0
    %v866 = vxor.u32 %v864, 2147483648
    %v867 = vmul.f32 %v866, 1.442695
    %v868 = vpow.pop %v867
    %v869 = vadd.f32 %v868, 1.0
    %v870 = vrcp.pop %v869
    %v871 = vmul.f32 %v869, %v870
    %v872 = vsub.f32 1.0, %v871
    %v873 = vmul.f32 %v870, %v872
    %v874 = vadd.f32 %v870, %v873
    %vm875 = vweird.f32 %v869
    %vm876 = vweird.f32 %v870
    %vm877 = vmor %vm875, %vm876
    %v878 = vsel %vm877, %v870, %v874
    %v879 = vand.u32 2147483647, %v869
    %vm880 = vcmp.eq.f32.partialorder %v879, 8.507059e+37
    %v881 = vand.u32 %v869, 2147483648
    %v882 = vor.u32 1.1754944e-38, %v881
    %v883 = vsel %vm880, %v882, %v878
    %v884 = vmul.f32 1.0, %v883
    %v885 = vtanh.pop %v864
    %v886 = vmul.f32 %v884, %v758
    %888 = vrot.lane.b32.xlu0 %v885, 120
    %v889 = vpop.permute.xlu0 %888
    %v891 = vmul.f32 %v884, %v889
    %893 = vrot.lane.b32.xlu0 %v891, 4
    %v894 = vpop.permute.xlu0 %893
    %v896 = vadd.f32 %v886, %v894
    %v897 = vtanh.pop %v896
    %899 = vrot.lane.b32.xlu0 %v897, 8
    %v900 = vpop.permute.xlu0 %899
    %v902 = vmul.f32 %v884, %v900
    %904 = vrot.lane.b32.xlu0 %v902, 116
    %v905 = vpop.permute.xlu0 %904
    %907 = vst.msk [vmem:[%s3 + $0xa] sm:$0x3] %vm216, %v905
    %v908 = vxor.u32 %v844, 2147483648
    %v909 = vmul.f32 %v908, 1.442695
    %v910 = vpow.pop %v909
    %v911 = vadd.f32 %v910, 1.0
    %v912 = vrcp.pop %v911
    %v913 = vmul.f32 %v911, %v912
    %v914 = vsub.f32 1.0, %v913
    %v915 = vmul.f32 %v912, %v914
    %v916 = vadd.f32 %v912, %v915
    %vm917 = vweird.f32 %v911
    %vm918 = vweird.f32 %v912
    %vm919 = vmor %vm917, %vm918
    %v920 = vsel %vm919, %v912, %v916
    %v921 = vand.u32 2147483647, %v911
    %vm922 = vcmp.eq.f32.partialorder %v921, 8.507059e+37
    %v923 = vand.u32 %v911, 2147483648
    %v924 = vor.u32 1.1754944e-38, %v923
    %v925 = vsel %vm922, %v924, %v920
    %v926 = vmul.f32 1.0, %v925
    %v927 = vtanh.pop %v844
    %v928 = vmul.f32 %v926, %v800
    %930 = vrot.lane.b32.xlu0 %v927, 64
    %v931 = vpop.permute.xlu0 %930
    %v933 = vmul.f32 %v926, %v931
    %935 = vrot.lane.b32.xlu0 %v933, 32
    %v936 = vpop.permute.xlu0 %935
    %v938 = vadd.f32 %v928, %v936
    %v939 = vtanh.pop %v938
    %941 = vrot.lane.b32.xlu0 %v939, 64
    %v942 = vpop.permute.xlu0 %941
    %v944 = vmul.f32 %v926, %v942
    %v945 = vld [vmem:[%s0 + $0xe] sm:$0x3]
    %947 = vrot.lane.b32.xlu0 %v944, 32
    %v948 = vpop.permute.xlu0 %947
    %950 = vst.msk [vmem:[#allocation2] sm:$0x3] %vm47, %v948
    %951 = vrot.lane.b32.xlu0 %v902, 20
    %v952 = vpop.permute.xlu0 %951
    %954 = vst.msk [vmem:[#allocation2] sm:$0x3] %vm49, %v952
    %956 = vrot.lane.b32.xlu0 %v945, 36
    %v957 = vpop.permute.xlu0 %956
    %959 = vst.msk [vmem:[#allocation2] sm:$0x3] %vm55, %v957
    %v960 = vld [vmem:[#allocation2] sm:$0x3]
    %v962 = vsel %vm58, %v960, 0
    %964 = vmatpush.msra.mxu0 0.0
    %965 = vmatpush.msra.mxu0 0.0
    %966 = vmatpush.msra.mxu0 0.0
    %967 = vmatpush.msra.mxu0 0.0
    %968 = vmatpush.msra.mxu0 0.0
    %969 = vmatpush.msra.mxu0 0.0
    %970 = vmatpush.msra.mxu0 0.0
    %971 = vmatpush.msra.mxu0 0.0
    %972 = vmatpush.msra.mxu0 0.0
    %973 = vmatpush.msra.mxu0 0.0
    %974 = vmatpush.msra.mxu0 0.0
    %975 = vmatpush.msra.mxu0 %v38
    %976 = vmatpush.msra.mxu0 %v36
    %977 = vmatpush.msra.mxu0 %v34
    %978 = vmatpush.msra.mxu0 %v32
    %979 = vmatpush.msra.mxu0 %v30
    %980 = vmatmul.f32.gmra.mxu0 %v962
    %v981 = vpop.f32.mrf.mxu0
    %v982 = vadd.f32 %v42, %v981
    %983 = vdwg.mxu0
    %984 = vmatpush.msra.mxu0 0.0
    %985 = vmatpush.msra.mxu0 0.0
    %986 = vmatpush.msra.mxu0 0.0
    %987 = vmatpush.msra.mxu0 0.0
    %988 = vmatpush.msra.mxu0 0.0
    %989 = vmatpush.msra.mxu0 0.0
    %990 = vmatpush.msra.mxu0 0.0
    %991 = vmatpush.msra.mxu0 0.0
    %992 = vmatpush.msra.mxu0 0.0
    %993 = vmatpush.msra.mxu0 0.0
    %994 = vmatpush.msra.mxu0 0.0
    %995 = vmatpush.msra.mxu0 %v39
    %996 = vmatpush.msra.mxu0 %v37
    %997 = vmatpush.msra.mxu0 %v35
    %998 = vmatpush.msra.mxu0 %v33
    %999 = vmatpush.msra.mxu0 %v31
    %1000 = vmatmul.f32.gmra.mxu0 %v962
    %v1001 = vpop.f32.mrf.mxu0
    %v1002 = vadd.f32 %v43, %v1001
    %1003 = vdwg.mxu0
    %v1004 = vxor.u32 %v1002, 2147483648
    %v1005 = vmul.f32 %v1004, 1.442695
    %v1006 = vpow.pop %v1005
    %v1007 = vadd.f32 %v1006, 1.0
    %v1008 = vrcp.pop %v1007
    %v1009 = vmul.f32 %v1007, %v1008
    %v1010 = vsub.f32 1.0, %v1009
    %v1011 = vmul.f32 %v1008, %v1010
    %v1012 = vadd.f32 %v1008, %v1011
    %vm1013 = vweird.f32 %v1007
    %vm1014 = vweird.f32 %v1008
    %vm1015 = vmor %vm1013, %vm1014
    %v1016 = vsel %vm1015, %v1008, %v1012
    %v1017 = vand.u32 2147483647, %v1007
    %vm1018 = vcmp.eq.f32.partialorder %v1017, 8.507059e+37
    %v1019 = vand.u32 %v1007, 2147483648
    %v1020 = vor.u32 1.1754944e-38, %v1019
    %v1021 = vsel %vm1018, %v1020, %v1016
    %v1022 = vmul.f32 1.0, %v1021
    %v1023 = vtanh.pop %v1002
    %v1024 = vmul.f32 %v1022, %v896
    %1026 = vrot.lane.b32.xlu0 %v1023, 120
    %v1027 = vpop.permute.xlu0 %1026
    %v1029 = vmul.f32 %v1022, %v1027
    %1031 = vrot.lane.b32.xlu0 %v1029, 4
    %v1032 = vpop.permute.xlu0 %1031
    %v1034 = vadd.f32 %v1024, %v1032
    %v1035 = vtanh.pop %v1034
    %1037 = vrot.lane.b32.xlu0 %v1035, 8
    %v1038 = vpop.permute.xlu0 %1037
    %v1040 = vmul.f32 %v1022, %v1038
    %1042 = vrot.lane.b32.xlu0 %v1040, 116
    %v1043 = vpop.permute.xlu0 %1042
    %1045 = vst.msk [vmem:[%s3 + $0xc] sm:$0x3] %vm216, %v1043
    %v1046 = vxor.u32 %v982, 2147483648
    %v1047 = vmul.f32 %v1046, 1.442695
    %v1048 = vpow.pop %v1047
    %v1049 = vadd.f32 %v1048, 1.0
    %v1050 = vrcp.pop %v1049
    %v1051 = vmul.f32 %v1049, %v1050
    %v1052 = vsub.f32 1.0, %v1051
    %v1053 = vmul.f32 %v1050, %v1052
    %v1054 = vadd.f32 %v1050, %v1053
    %vm1055 = vweird.f32 %v1049
    %vm1056 = vweird.f32 %v1050
    %vm1057 = vmor %vm1055, %vm1056
    %v1058 = vsel %vm1057, %v1050, %v1054
    %v1059 = vand.u32 2147483647, %v1049
    %vm1060 = vcmp.eq.f32.partialorder %v1059, 8.507059e+37
    %v1061 = vand.u32 %v1049, 2147483648
    %v1062 = vor.u32 1.1754944e-38, %v1061
    %v1063 = vsel %vm1060, %v1062, %v1058
    %v1064 = vmul.f32 1.0, %v1063
    %v1065 = vtanh.pop %v982
    %v1066 = vmul.f32 %v1064, %v938
    %1068 = vrot.lane.b32.xlu0 %v1065, 64
    %v1069 = vpop.permute.xlu0 %1068
    %v1071 = vmul.f32 %v1064, %v1069
    %1073 = vrot.lane.b32.xlu0 %v1071, 32
    %v1074 = vpop.permute.xlu0 %1073
    %v1076 = vadd.f32 %v1066, %v1074
    %v1077 = vtanh.pop %v1076
    %1079 = vrot.lane.b32.xlu0 %v1077, 64
    %v1080 = vpop.permute.xlu0 %1079
    %v1082 = vmul.f32 %v1064, %v1080
    %v1083 = vld [vmem:[%s0 + $0xe] sm:$0x3]
    %1085 = vrot.lane.b32.xlu0 %v1082, 32
    %v1086 = vpop.permute.xlu0 %1085
    %1088 = vst.msk [vmem:[#allocation2] sm:$0x3] %vm47, %v1086
    %1089 = vrot.lane.b32.xlu0 %v1040, 20
    %v1090 = vpop.permute.xlu0 %1089
    %1092 = vst.msk [vmem:[#allocation2] sm:$0x3] %vm49, %v1090
    %1094 = vrot.lane.b32.xlu0 %v1083, 36
    %v1095 = vpop.permute.xlu0 %1094
    %1097 = vst.msk [vmem:[#allocation2] sm:$0x3] %vm55, %v1095
    %v1098 = vld [vmem:[#allocation2] sm:$0x3]
    %v1100 = vsel %vm58, %v1098, 0
    %1102 = vmatpush.msra.mxu0 0.0
    %1103 = vmatpush.msra.mxu0 0.0
    %1104 = vmatpush.msra.mxu0 0.0
    %1105 = vmatpush.msra.mxu0 0.0
    %1106 = vmatpush.msra.mxu0 0.0
    %1107 = vmatpush.msra.mxu0 0.0
    %1108 = vmatpush.msra.mxu0 0.0
    %1109 = vmatpush.msra.mxu0 0.0
    %1110 = vmatpush.msra.mxu0 0.0
    %1111 = vmatpush.msra.mxu0 0.0
    %1112 = vmatpush.msra.mxu0 0.0
    %1113 = vmatpush.msra.mxu0 %v39
    %1114 = vmatpush.msra.mxu0 %v37
    %1115 = vmatpush.msra.mxu0 %v35
    %1116 = vmatpush.msra.mxu0 %v33
    %1117 = vmatpush.msra.mxu0 %v31
    %1118 = vmatmul.f32.gmra.mxu0 %v1100
    %v1119 = vpop.f32.mrf.mxu0
    %v1120 = vadd.f32 %v43, %v1119
    %1121 = vdwg.mxu0
    %v1122 = vxor.u32 %v1120, 2147483648
    %v1123 = vmul.f32 %v1122, 1.442695
    %v1124 = vpow.pop %v1123
    %v1125 = vadd.f32 %v1124, 1.0
    %v1126 = vrcp.pop %v1125
    %v1127 = vmul.f32 %v1125, %v1126
    %v1128 = vsub.f32 1.0, %v1127
    %v1129 = vmul.f32 %v1126, %v1128
    %v1130 = vadd.f32 %v1126, %v1129
    %vm1131 = vweird.f32 %v1125
    %vm1132 = vweird.f32 %v1126
    %vm1133 = vmor %vm1131, %vm1132
    %v1134 = vsel %vm1133, %v1126, %v1130
    %v1135 = vand.u32 2147483647, %v1125
    %vm1136 = vcmp.eq.f32.partialorder %v1135, 8.507059e+37
    %v1137 = vand.u32 %v1125, 2147483648
    %v1138 = vor.u32 1.1754944e-38, %v1137
    %v1139 = vsel %vm1136, %v1138, %v1134
    %v1140 = vmul.f32 1.0, %v1139
    %v1141 = vtanh.pop %v1120
    %v1142 = vmul.f32 %v1140, %v1034
    %1144 = vrot.lane.b32.xlu0 %v1141, 120
    %v1145 = vpop.permute.xlu0 %1144
    %v1147 = vmul.f32 %v1140, %v1145
    %1149 = vrot.lane.b32.xlu0 %v1147, 4
    %v1150 = vpop.permute.xlu0 %1149
    %v1152 = vadd.f32 %v1142, %v1150
    %v1153 = vtanh.pop %v1152
    %1155 = vrot.lane.b32.xlu0 %v1153, 8
    %v1156 = vpop.permute.xlu0 %1155
    %v1158 = vmul.f32 %v1140, %v1156
    %1160 = vrot.lane.b32.xlu0 %v1158, 116
    %v1161 = vpop.permute.xlu0 %1160
    %1163 = vst.msk [vmem:[%s3 + $0xe] sm:$0x3] %vm216, %v1161
    // Predicated region
    $region18: #{lstm_autoencoder_forward.1} parent=1 // pred_check
      _
    $region19: #{lstm_autoencoder_forward.1} parent=1 // pred_check_branch
      %1165 = sbr.rel (0) target = $region21
    $region20: #{lstm_autoencoder_forward.1} parent=1 // pred_region
      _
    $region21: #{lstm_autoencoder_forward.1} parent=1 // pred_fallthru
      _
    // Predicated region
    $region22: #{lstm_autoencoder_forward.1} parent=1 // pred_check
      _
    $region23: #{lstm_autoencoder_forward.1} parent=1 // pred_check_branch
      %1167 = sbr.rel (0) target = $region25
    $region24: #{lstm_autoencoder_forward.1} parent=1 // pred_region
      _
    $region25: #{lstm_autoencoder_forward.1} parent=1 // pred_fallthru
      _
    %1168 = vsyncpa [#allocation4], 1

</llo_original>
